<compile_context>
chip_gen: v5e
topology: v5e:2x2
jax: 0.10.0
libtpu: 0.0.40
codegen_flags: <defaults>
</compile_context>

<pallas_src>
import functools

import jax
import jax.numpy as jnp
from jax import lax
from jax.experimental import pallas as pl
from jax.experimental.pallas import tpu as pltpu

EPS = 1e-5  # torch.nn.LayerNorm default eps


def _layernorm(x, gamma, beta):
    mean = jnp.mean(x, axis=-1, keepdims=True)
    var = jnp.mean((x - mean) ** 2, axis=-1, keepdims=True)
    return (x - mean) * lax.rsqrt(var + EPS) * gamma + beta


def _gelu(x):
    # exact (erf) GELU, matching torch.nn.GELU default
    return 0.5 * x * (1.0 + lax.erf(x * (2.0 ** -0.5)))


# ----------------------------------------------------------------------------
# hardware-aware knobs
# ----------------------------------------------------------------------------
_VMEM_CAP = None


def _vmem_cap_bytes():
    """Physical VMEM capacity (bytes); conservative 64 MiB fallback (v7x)."""
    global _VMEM_CAP
    if _VMEM_CAP is None:
        cap = None
        try:
            cap = int(getattr(pltpu.get_tpu_info(), "vmem_capacity_bytes", 0)) or None
        except Exception:
            cap = None
        _VMEM_CAP = cap if cap else 64 * 1024 * 1024
    return _VMEM_CAP


def _vmem_limit_bytes():
    """Scoped-VMEM limit: capacity minus headroom, capped at 100 MiB."""
    cap = _vmem_cap_bytes()
    return max(32 * 1024 * 1024, min(cap - 16 * 1024 * 1024, 100 * 1024 * 1024))


def _default_target_rows():
    # 128 MiB parts (v5e/v6e) can afford bigger M tiles; keep 256 on v7x.
    return 512 if _vmem_cap_bytes() >= 100 * 1024 * 1024 else 256


# ----------------------------------------------------------------------------
# single-buffering capability probe (pipeline_mode=pl.Buffered(1))
# ----------------------------------------------------------------------------
_SB_CACHE = None


def _sb_probe_kernel(x_ref, o_ref):
    o_ref[...] = x_ref[...]


def _single_buffer_supported():
    """True if this JAX/Mosaic accepts pipeline_mode=pl.Buffered(1) on a BlockSpec."""
    global _SB_CACHE
    if _SB_CACHE is not None:
        return _SB_CACHE
    ok = False
    if hasattr(pl, "Buffered"):
        try:
            x = jnp.arange(8 * 128, dtype=jnp.float32).reshape(8, 128)
            out = pl.pallas_call(
                _sb_probe_kernel,
                out_shape=jax.ShapeDtypeStruct((8, 128), jnp.float32),
                grid=(1,),
                in_specs=[pl.BlockSpec((8, 128), lambda i: (0, 0),
                                       pipeline_mode=pl.Buffered(1))],
                out_specs=pl.BlockSpec((8, 128), lambda i: (0, 0)),
            )(x)
            jax.block_until_ready(out)
            ok = bool(jnp.all(out == x))
        except Exception:
            ok = False
    _SB_CACHE = ok
    return ok


def _const_spec(shape, single_buffer):
    """BlockSpec for an operand whose block index never changes (weights etc.)."""
    index_map = lambda *_: (0,) * len(shape)
    if single_buffer:
        return pl.BlockSpec(shape, index_map, pipeline_mode=pl.Buffered(1))
    return pl.BlockSpec(shape, index_map)


def _pick_block(total, target, quantum):
    """Largest divisor of `total` that is <= target and a multiple of `quantum`
    (or `total` itself when total <= target)."""
    if total <= target:
        return total
    b = max(quantum, (target // quantum) * quantum)
    while b > quantum and total % b:
        b -= quantum
    if total % b:
        return total  # fallback (all shapes in this script divide evenly)
    return b


# ----------------------------------------------------------------------------
# attention sub-layer: pre-norm MHA + residual
# ----------------------------------------------------------------------------
def attention_layer_kernel(x_ref, ln1g_ref, ln1b_ref, wqkv_ref, wo_ref, o_ref,
                           *, heads, dim_head):
    bt, N, D = x_ref.shape
    M = bt * N

    x = x_ref[...].reshape(M, D)                                  # (M, D) f32

    # pre-norm; attention scale is pre-folded into the q columns of w_qkv
    h = _layernorm(x, ln1g_ref[...], ln1b_ref[...]).astype(jnp.bfloat16)
    qkv = jnp.dot(h, wqkv_ref[...], preferred_element_type=jnp.float32)  # (M, 3D)
    qkv = qkv.astype(jnp.bfloat16)                # single cast of the full tensor
    q = qkv[:, :D].reshape(bt, N, D)
    k = qkv[:, D:2 * D].reshape(bt, N, D)
    v = qkv[:, 2 * D:].reshape(bt, N, D)

    # TODO(synk): Mosaic dot_general supports only one batch dim, so heads are a
    # small static unroll (3-D einsums) rather than a single 4-D einsum; the
    # output projection is ACCUMULATED per head so every store stays lane-dense
    # (no 32-lane masked scratch writes, no attention slab in VMEM).
    out = x                                                        # f32 residual acc
    for hd in range(heads):
        s0, s1 = hd * dim_head, (hd + 1) * dim_head
        s = jnp.einsum('bqd,bkd->bqk', q[:, :, s0:s1], k[:, :, s0:s1],
                       preferred_element_type=jnp.float32)         # (bt, N, N)
        s = s - jnp.max(s, axis=-1, keepdims=True)
        p = jnp.exp(s)
        # approx reciprocal on the EUP slot (documented deviation from exact softmax)
        p = p * pl.reciprocal(jnp.sum(p, axis=-1, keepdims=True), approx=True)
        o_h = jnp.einsum('bqk,bkd->bqd', p.astype(jnp.bfloat16), v[:, :, s0:s1],
                         preferred_element_type=jnp.float32)        # (bt, N, dh)
        out = out + jnp.dot(o_h.reshape(M, dim_head).astype(jnp.bfloat16),
                            wo_ref[s0:s1, :],
                            preferred_element_type=jnp.float32)

    o_ref[...] = out.reshape(bt, N, D)


def run_attention_layer(x, p, *, heads, dim_head, target_rows=None):
    B, N, D = x.shape
    D3 = p["w_qkv"].shape[1]
    if target_rows is None:
        target_rows = _default_target_rows()

    # flatten batches into the matmul M dimension; keep >= 2 grid steps so both
    # v7x TensorCores get work when B allows it.
    bt = max(1, min(B, max(1, target_rows // max(N, 1))))
    if B >= 2:
        bt = min(bt, B // 2)
    while B % bt:
        bt -= 1

    sb = _single_buffer_supported()
    cs = lambda shape: _const_spec(shape, sb)

    kernel = functools.partial(attention_layer_kernel, heads=heads, dim_head=dim_head)
    return pl.pallas_call(
        kernel,
        out_shape=jax.ShapeDtypeStruct((B, N, D), jnp.float32),
        grid=(B // bt,),
        in_specs=[
            pl.BlockSpec((bt, N, D), lambda m: (m, 0, 0)),        # x
            cs((1, D)), cs((1, D)),                               # ln1 gamma/beta
            cs((D, D3)),                                          # fused w_qkv (bf16)
            cs((D, D)),                                           # wo (bf16)
        ],
        out_specs=pl.BlockSpec((bt, N, D), lambda m: (m, 0, 0)),
        compiler_params=pltpu.CompilerParams(
            dimension_semantics=("parallel",),
            vmem_limit_bytes=_vmem_limit_bytes()),
    )(x, p["ln1_g"], p["ln1_b"], p["w_qkv"], p["wo"])


# ----------------------------------------------------------------------------
# feed-forward sub-layer (pre-norm GELU FF + residual) with the wrapper's final
# LayerNorm fused into the epilogue -> bf16 normed rows for the logits matmul
# ----------------------------------------------------------------------------
def ff_final_norm_kernel(x_ref, ln2g_ref, ln2b_ref, w1_ref, b1_ref, w2_ref, b2_ref,
                         ng_ref, nb_ref, o_ref):
    x = x_ref[...]                                                 # (blk_m, D) f32
    h = _layernorm(x, ln2g_ref[...], ln2b_ref[...]).astype(jnp.bfloat16)
    ff = jnp.dot(h, w1_ref[...], preferred_element_type=jnp.float32) + b1_ref[...]
    ff = _gelu(ff).astype(jnp.bfloat16)
    ff = jnp.dot(ff, w2_ref[...], preferred_element_type=jnp.float32) + b2_ref[...]
    x = x + ff
    # fused final LayerNorm (TransformerWrapper.norm); emitted once as bf16
    o_ref[...] = _layernorm(x, ng_ref[...], nb_ref[...]).astype(o_ref.dtype)


def run_ff_final_norm(x2, p, norm_g, norm_b, *, target_rows=None):
    M, D = x2.shape
    D_ff = p["w1"].shape[1]
    if target_rows is None:
        target_rows = _default_target_rows()
    tgt = min(target_rows, max(8, M // 2)) if M >= 16 else M       # >= 2 grid steps
    blk_m = _pick_block(M, tgt, 8)

    sb = _single_buffer_supported()
    cs = lambda shape: _const_spec(shape, sb)

    return pl.pallas_call(
        ff_final_norm_kernel,
        out_shape=jax.ShapeDtypeStruct((M, D), jnp.bfloat16),
        grid=(M // blk_m,),
        in_specs=[
            pl.BlockSpec((blk_m, D), lambda m: (m, 0)),           # rows
            cs((1, D)), cs((1, D)),                               # ln2 gamma/beta
            cs((D, D_ff)), cs((1, D_ff)),                         # w1 (bf16), b1
            cs((D_ff, D)), cs((1, D)),                            # w2 (bf16), b2
            cs((1, D)), cs((1, D)),                               # final-norm gamma/beta
        ],
        out_specs=pl.BlockSpec((blk_m, D), lambda m: (m, 0)),
        compiler_params=pltpu.CompilerParams(
            dimension_semantics=("parallel",),
            vmem_limit_bytes=_vmem_limit_bytes()),
    )(x2, p["ln2_g"], p["ln2_b"], p["w1"], p["b1"], p["w2"], p["b2"], norm_g, norm_b)


# ----------------------------------------------------------------------------
# logits = normed_rows @ token_emb.T, tiled over (vocab OUTER, rows INNER)
# ----------------------------------------------------------------------------
def logits_kernel(h_ref, emb_ref, o_ref):
    # logits tile = h @ emb_tile^T : contract D of h with D of emb (blk_v, D)
    o_ref[...] = lax.dot_general(h_ref[...], emb_ref[...], (((1,), (1,)), ((), ())),
                                 preferred_element_type=jnp.float32
                                 ).astype(o_ref.dtype)


def run_logits(h_bf16, emb_bf16, *, blk_m=512, blk_v=1024, out_dtype=jnp.float32):
    M, D = h_bf16.shape
    V = emb_bf16.shape[0]
    # MXU-friendly quanta: multiples of 256 on v6e/v7x when divisible.
    q_m = 256 if (M % 256 == 0 and blk_m >= 256) else (128 if M % 128 == 0 else 8)
    q_v = 256 if (V % 256 == 0 and blk_v >= 256) else 128
    blk_m = _pick_block(M, blk_m, q_m)
    blk_v = _pick_block(V, blk_v, q_v)

    return pl.pallas_call(
        logits_kernel,
        out_shape=jax.ShapeDtypeStruct((M, V), out_dtype),
        # vocab axis OUTER: the (blk_v, D) embedding tile's block index is
        # constant across the inner row axis, so the (V, D) table is streamed
        # from HBM exactly once (it is the dominant DMA traffic).
        grid=(V // blk_v, M // blk_m),
        in_specs=[
            pl.BlockSpec((blk_m, D), lambda v, m: (m, 0)),        # bf16 normed rows
            pl.BlockSpec((blk_v, D), lambda v, m: (v, 0)),        # vocab tile (bf16)
        ],
        out_specs=pl.BlockSpec((blk_m, blk_v), lambda v, m: (m, v)),
        compiler_params=pltpu.CompilerParams(
            dimension_semantics=("parallel", "parallel"),
            vmem_limit_bytes=_vmem_limit_bytes()),
    )(h_bf16, emb_bf16)


# ----------------------------------------------------------------------------
# host-side parameter prep + full forward
# ----------------------------------------------------------------------------
def prepare_params(params, *, heads, dim_head):
    """Fuse QKV, fold the attention scale into the q columns, cast matmul
    weights / embedding table to bf16 (halves DMA + VMEM, 2x MXU throughput)."""
    dim = params["token_emb"].shape[1]
    # kernel assumes the attention inner dim equals the model dim
    assert heads * dim_head == dim, (heads, dim_head, dim)
    scale = dim_head ** -0.5
    p = params["layer0"]
    w_qkv = jnp.concatenate([p["wq"] * scale, p["wk"], p["wv"]], axis=1)
    return {
        "token_emb": params["token_emb"],                        # f32 (gather)
        "emb_bf16": params["token_emb"].astype(jnp.bfloat16),    # logits matmul
        "pos_emb": params["pos_emb"],
        "norm_g": params["norm_g"], "norm_b": params["norm_b"],
        "layer0": {
            "ln1_g": p["ln1_g"], "ln1_b": p["ln1_b"],
            "w_qkv": w_qkv.astype(jnp.bfloat16),
            "wo": p["wo"].astype(jnp.bfloat16),
            "ln2_g": p["ln2_g"], "ln2_b": p["ln2_b"],
            "w1": p["w1"].astype(jnp.bfloat16), "b1": p["b1"],
            "w2": p["w2"].astype(jnp.bfloat16), "b2": p["b2"],
        },
    }


def transformer_wrapper_forward(tokens, prepared, *, heads, dim_head,
                                logits_blk_v=1024, logits_dtype=jnp.float32):
    """Full TransformerWrapper.forward (logits f32 by default, faithful to module)."""
    B, n = tokens.shape
    # embedding gather + positional embedding add (plain-JAX glue)
    x = prepared["token_emb"][tokens] + prepared["pos_emb"][:n][None, :, :]
    D = x.shape[-1]
    V = prepared["token_emb"].shape[0]
    # attn_layers (1-layer pre-norm encoder), split into attention / FF kernels
    x = run_attention_layer(x, prepared["layer0"], heads=heads, dim_head=dim_head)
    h = run_ff_final_norm(x.reshape(B * n, D), prepared["layer0"],
                          prepared["norm_g"], prepared["norm_b"])
    # final logits matmul, vocab-tiled
    logits = run_logits(h, prepared["emb_bf16"], blk_v=logits_blk_v,
                        out_dtype=logits_dtype)
    return logits.reshape(B, n, V)


# ---------------- references for sanity checking ----------------
def _ln_ref(v, g, b):
    m = v.mean(-1, keepdims=True)
    va = ((v - m) ** 2).mean(-1, keepdims=True)
    return (v - m) / jnp.sqrt(va + EPS) * g + b


def _reference_bf16(tokens, prepared, *, heads, dim_head):
    """Mirrors the kernel math (bf16 matmul operands, f32 accumulate)."""
    B, n = tokens.shape
    x = prepared["token_emb"][tokens] + prepared["pos_emb"][:n][None, :, :]
    p = prepared["layer0"]
    D = x.shape[-1]
    M = B * n
    xm = x.reshape(M, D)

    h = _ln_ref(xm, p["ln1_g"], p["ln1_b"]).astype(jnp.bfloat16)
    qkv = jnp.dot(h, p["w_qkv"], preferred_element_type=jnp.float32)
    qkv = qkv.astype(jnp.bfloat16)
    q = qkv[:, :D].reshape(B, n, heads, dim_head)
    k = qkv[:, D:2 * D].reshape(B, n, heads, dim_head)
    v = qkv[:, 2 * D:].reshape(B, n, heads, dim_head)
    s = jnp.einsum('bqhd,bkhd->bhqk', q, k, preferred_element_type=jnp.float32)
    a = jax.nn.softmax(s, axis=-1)
    o = jnp.einsum('bhqk,bkhd->bqhd', a.astype(jnp.bfloat16), v,
                   preferred_element_type=jnp.float32).reshape(M, D)
    x1 = xm + jnp.dot(o.astype(jnp.bfloat16), p["wo"],
                      preferred_element_type=jnp.float32)
    h2 = _ln_ref(x1, p["ln2_g"], p["ln2_b"]).astype(jnp.bfloat16)
    ff = jnp.dot(h2, p["w1"], preferred_element_type=jnp.float32) + p["b1"]
    ff = 0.5 * ff * (1.0 + lax.erf(ff * (2.0 ** -0.5)))
    xo = x1 + jnp.dot(ff.astype(jnp.bfloat16), p["w2"],
                      preferred_element_type=jnp.float32) + p["b2"]
    hn = _ln_ref(xo, prepared["norm_g"], prepared["norm_b"]).astype(jnp.bfloat16)
    logits = jnp.dot(hn, prepared["emb_bf16"].T, preferred_element_type=jnp.float32)
    return logits.reshape(B, n, -1)


def _reference_f32(tokens, params, *, heads, dim_head):
    """Faithful full-f32 reference of the original PyTorch module."""
    _, n = tokens.shape
    x = params["token_emb"][tokens] + params["pos_emb"][:n][None, :, :]
    p = params["layer0"]
    h = _ln_ref(x, p["ln1_g"], p["ln1_b"])
    q = h @ p["wq"]; k = h @ p["wk"]; v = h @ p["wv"]
    B, N, D = x.shape
    qh = q.reshape(B, N, heads, dim_head).transpose(0, 2, 1, 3)
    kh = k.reshape(B, N, heads, dim_head).transpose(0, 2, 1, 3)
    vh = v.reshape(B, N, heads, dim_head).transpose(0, 2, 1, 3)
    s = jnp.einsum("bhqd,bhkd->bhqk", qh, kh) * (dim_head ** -0.5)
    a = jax.nn.softmax(s, axis=-1)
    o = jnp.einsum("bhqk,bhkd->bhqd", a, vh).transpose(0, 2, 1, 3).reshape(B, N, D)
    x = x + o @ p["wo"]
    h2 = _ln_ref(x, p["ln2_g"], p["ln2_b"])
    ff = jax.nn.gelu(h2 @ p["w1"] + p["b1"], approximate=False)
    x = x + ff @ p["w2"] + p["b2"]
    x = _ln_ref(x, params["norm_g"], params["norm_b"])
    return x @ params["token_emb"].T


if __name__ == "__main__":
    # small config consistent with the module
    num_tokens, max_seq_len = 256, 16
    dim, heads, dim_head = 128, 4, 32
    ff_mult = 4
    B, N = 2, 8

    key = jax.random.PRNGKey(0)
    ks = list(jax.random.split(key, 16))

    def normal(k, shape, std):
        return (jax.random.normal(k, shape, jnp.float32) * std).astype(jnp.float32)

    params = {
        "token_emb": normal(ks[0], (num_tokens, dim), 0.02),   # init_(): std=0.02
        "pos_emb":   normal(ks[1], (max_seq_len, dim), 0.02),  # init_(): std=0.02
        "norm_g": jnp.ones((1, dim), jnp.float32),
        "norm_b": jnp.zeros((1, dim), jnp.float32),
        "layer0": {
            "ln1_g": jnp.ones((1, dim), jnp.float32),
            "ln1_b": jnp.zeros((1, dim), jnp.float32),
            "wq": normal(ks[2], (dim, dim), 0.02),
            "wk": normal(ks[3], (dim, dim), 0.02),
            "wv": normal(ks[4], (dim, dim), 0.02),
            "wo": normal(ks[5], (dim, dim), 0.02),
            "ln2_g": jnp.ones((1, dim), jnp.float32),
            "ln2_b": jnp.zeros((1, dim), jnp.float32),
            "w1": normal(ks[6], (dim, dim * ff_mult), 0.02),
            "b1": jnp.zeros((1, dim * ff_mult), jnp.float32),
            "w2": normal(ks[7], (dim * ff_mult, dim), 0.02),
            "b2": jnp.zeros((1, dim), jnp.float32),
        },
    }

    tokens = jax.random.randint(ks[8], (B, N), 0, num_tokens, dtype=jnp.int32)

    prepared = prepare_params(params, heads=heads, dim_head=dim_head)
    # logits_blk_v=128 exercises the vocab-tiled logits grid (2 tiles at V=256)
    logits = transformer_wrapper_forward(tokens, prepared, heads=heads,
                                         dim_head=dim_head, logits_blk_v=128)
    logits = jax.block_until_ready(logits)
    assert logits.shape == (B, N, num_tokens), logits.shape

    # tight check vs a reference with identical bf16 matmul operands
    ref_bf16 = _reference_bf16(tokens, prepared, heads=heads, dim_head=dim_head)
    assert jnp.allclose(logits, ref_bf16, atol=2e-2, rtol=2e-2), \
        float(jnp.max(jnp.abs(logits - ref_bf16)))

    # loose check vs the faithful full-f32 reference (bounds bf16 drift)
    ref_f32 = _reference_f32(tokens, params, heads=heads, dim_head=dim_head)
    assert jnp.allclose(logits, ref_f32, atol=1e-1, rtol=1e-1), \
        float(jnp.max(jnp.abs(logits - ref_f32)))

    print("KERNEL_OK")
</pallas_src>

<mosaic_0001>
module attributes {stable_mosaic.version = 11 : i64} {
  func.func @_sb_probe_kernel(%arg0: i32, %arg1: memref<8x128xf32, #tpu.memory_space<vmem>>, %arg2: memref<8x128xf32, #tpu.memory_space<vmem>>) attributes {dimension_semantics = [#tpu.dimension_semantics<arbitrary>], iteration_bounds = array<i64: 1>, scalar_prefetch = 0 : i64, scratch_operands = 0 : i64, tpu.core_type = #tpu.core_type<tc>, window_params = [{pipeline_mode = #tpu.pipeline_mode<synchronous>, transform_indices = @transform_0, window_bounds = array<i64: 8, 128>}, {pipeline_mode = #tpu.pipeline_mode<synchronous>, transform_indices = @transform_1, window_bounds = array<i64: 8, 128>}]} {
    %c0 = arith.constant 0 : index
    %c0_0 = arith.constant 0 : index
    %0 = vector.load %arg1[%c0, %c0_0] : memref<8x128xf32, #tpu.memory_space<vmem>>, vector<8x128xf32>
    %c0_1 = arith.constant 0 : index
    %c0_2 = arith.constant 0 : index
    %1 = vector.load %arg2[%c0_1, %c0_2] : memref<8x128xf32, #tpu.memory_space<vmem>>, vector<8x128xf32>
    tpu.vector_store %arg2[%c0_1, %c0_2], %0 {strides = array<i32>} : memref<8x128xf32, #tpu.memory_space<vmem>>, vector<8x128xf32>,
    return
  }
  func.func @transform_0(%arg0: i32) -> (i32, i32) {
    %c0_i32 = arith.constant 0 : i32
    %c0_i32_0 = arith.constant 0 : i32
    %c0_i32_1 = arith.constant 0 : i32
    return %c0_i32, %c0_i32_0 : i32, i32
  }
  func.func @transform_1(%arg0: i32) -> (i32, i32) {
    %c0_i32 = arith.constant 0 : i32
    %c0_i32_0 = arith.constant 0 : i32
    %c0_i32_1 = arith.constant 0 : i32
    return %c0_i32, %c0_i32_0 : i32, i32
  }
}

module attributes {stable_mosaic.version = 11 : i64} {
  func.func @attention_layer_kernel(%arg0: i32, %arg1: memref<1x8x128xf32, #tpu.memory_space<vmem>>, %arg2: memref<1x128xf32, #tpu.memory_space<vmem>>, %arg3: memref<1x128xf32, #tpu.memory_space<vmem>>, %arg4: memref<128x384xbf16, #tpu.memory_space<vmem>>, %arg5: memref<128x128xbf16, #tpu.memory_space<vmem>>, %arg6: memref<1x8x128xf32, #tpu.memory_space<vmem>>) attributes {dimension_semantics = [#tpu.dimension_semantics<parallel>], iteration_bounds = array<i64: 2>, scalar_prefetch = 0 : i64, scratch_operands = 0 : i64, tpu.core_type = #tpu.core_type<tc>, window_params = [{transform_indices = @transform_0, window_bounds = array<i64: 1, 8, 128>}, {pipeline_mode = #tpu.pipeline_mode<synchronous>, transform_indices = @transform_1, window_bounds = array<i64: 1, 128>}, {pipeline_mode = #tpu.pipeline_mode<synchronous>, transform_indices = @transform_2, window_bounds = array<i64: 1, 128>}, {pipeline_mode = #tpu.pipeline_mode<synchronous>, transform_indices = @transform_3, window_bounds = array<i64: 128, 384>}, {pipeline_mode = #tpu.pipeline_mode<synchronous>, transform_indices = @transform_4, window_bounds = array<i64: 128, 128>}, {transform_indices = @transform_5, window_bounds = array<i64: 1, 8, 128>}]} {
    %c0 = arith.constant 0 : index
    %c0_0 = arith.constant 0 : index
    %c0_1 = arith.constant 0 : index
    %0 = vector.load %arg1[%c0, %c0_0, %c0_1] : memref<1x8x128xf32, #tpu.memory_space<vmem>>, vector<1x8x128xf32>
    %1 = vector.shape_cast %0 : vector<1x8x128xf32> to vector<8x128xf32>
    %c0_2 = arith.constant 0 : index
    %c0_3 = arith.constant 0 : index
    %2 = vector.load %arg2[%c0_2, %c0_3] : memref<1x128xf32, #tpu.memory_space<vmem>>, vector<1x128xf32>
    %c0_4 = arith.constant 0 : index
    %c0_5 = arith.constant 0 : index
    %3 = vector.load %arg3[%c0_4, %c0_5] : memref<1x128xf32, #tpu.memory_space<vmem>>, vector<1x128xf32>
    %cst = arith.constant dense<0.000000e+00> : vector<8xf32>
    %4 = vector.multi_reduction <add>, %1, %cst [1] : vector<8x128xf32> to vector<8xf32>
    %5 = vector.shape_cast %4 : vector<8xf32> to vector<8x1xf32>
    %cst_6 = arith.constant 1.280000e+02 : f32
    %6 = vector.broadcast %cst_6 : f32 to vector<8x1xf32>
    %7 = arith.divf %5, %6 : vector<8x1xf32>
    %8 = vector.broadcast %7 : vector<8x1xf32> to vector<8x128xf32>
    %9 = arith.subf %1, %8 : vector<8x128xf32>
    %10 = arith.mulf %9, %9 : vector<8x128xf32>
    %cst_7 = arith.constant dense<0.000000e+00> : vector<8xf32>
    %11 = vector.multi_reduction <add>, %10, %cst_7 [1] : vector<8x128xf32> to vector<8xf32>
    %12 = vector.shape_cast %11 : vector<8xf32> to vector<8x1xf32>
    %cst_8 = arith.constant 1.280000e+02 : f32
    %13 = vector.broadcast %cst_8 : f32 to vector<8x1xf32>
    %14 = arith.divf %12, %13 : vector<8x1xf32>
    %15 = vector.broadcast %7 : vector<8x1xf32> to vector<8x128xf32>
    %16 = arith.subf %1, %15 : vector<8x128xf32>
    %cst_9 = arith.constant 9.99999974E-6 : f32
    %17 = vector.broadcast %cst_9 : f32 to vector<8x1xf32>
    %18 = arith.addf %14, %17 : vector<8x1xf32>
    %19 = math.rsqrt %18 : vector<8x1xf32>
    %20 = vector.broadcast %19 : vector<8x1xf32> to vector<8x128xf32>
    %21 = arith.mulf %16, %20 : vector<8x128xf32>
    %22 = vector.broadcast %2 : vector<1x128xf32> to vector<8x128xf32>
    %23 = arith.mulf %21, %22 : vector<8x128xf32>
    %24 = vector.broadcast %3 : vector<1x128xf32> to vector<8x128xf32>
    %25 = arith.addf %23, %24 : vector<8x128xf32>
    %26 = arith.truncf %25 : vector<8x128xf32> to vector<8x128xbf16>
    %c0_10 = arith.constant 0 : index
    %c0_11 = arith.constant 0 : index
    %27 = vector.load %arg4[%c0_10, %c0_11] : memref<128x384xbf16, #tpu.memory_space<vmem>>, vector<128x384xbf16>
    %cst_12 = arith.constant dense<0.000000e+00> : vector<8x384xf32>
    %28 = tpu.matmul %26, %27, %cst_12 {dimension_numbers = #tpu.dot_dimension_numbers<[1], [0], [0], [1], [0, 0, 1, 1], [], []>} : vector<8x128xbf16>, vector<128x384xbf16>, vector<8x384xf32> -> vector<8x384xf32>
    %29 = arith.truncf %28 : vector<8x384xf32> to vector<8x384xbf16>
    %30 = vector.extract_strided_slice %29 {offsets = [0, 0], sizes = [8, 128], strides = [1, 1]} : vector<8x384xbf16> to vector<8x128xbf16>
    %31 = vector.shape_cast %30 : vector<8x128xbf16> to vector<1x8x128xbf16>
    %32 = vector.extract_strided_slice %29 {offsets = [0, 128], sizes = [8, 128], strides = [1, 1]} : vector<8x384xbf16> to vector<8x128xbf16>
    %33 = vector.shape_cast %32 : vector<8x128xbf16> to vector<1x8x128xbf16>
    %34 = vector.extract_strided_slice %29 {offsets = [0, 256], sizes = [8, 128], strides = [1, 1]} : vector<8x384xbf16> to vector<8x128xbf16>
    %35 = vector.shape_cast %34 : vector<8x128xbf16> to vector<1x8x128xbf16>
    %36 = vector.extract_strided_slice %31 {offsets = [0, 0, 0], sizes = [1, 8, 32], strides = [1, 1, 1]} : vector<1x8x128xbf16> to vector<1x8x32xbf16>
    %37 = vector.extract_strided_slice %33 {offsets = [0, 0, 0], sizes = [1, 8, 32], strides = [1, 1, 1]} : vector<1x8x128xbf16> to vector<1x8x32xbf16>
    "tpu.trace_start"() <{level = 10 : i32, message = "bqd,bkd->bqk"}> : () -> ()
    %cst_13 = arith.constant dense<0.000000e+00> : vector<1x8x8xf32>
    %38 = tpu.matmul %36, %37, %cst_13 {dimension_numbers = #tpu.dot_dimension_numbers<[2], [2], [1], [1], [0, 0, 0, 1, 1, 1], [0], [0]>} : vector<1x8x32xbf16>, vector<1x8x32xbf16>, vector<1x8x8xf32> -> vector<1x8x8xf32>
    "tpu.trace_stop"() : () -> ()
    %cst_14 = arith.constant dense<0xFF800000> : vector<1x8xf32>
    %39 = vector.multi_reduction <maximumf>, %38, %cst_14 [2] : vector<1x8x8xf32> to vector<1x8xf32>
    %40 = vector.shape_cast %39 : vector<1x8xf32> to vector<1x8x1xf32>
    %41 = vector.broadcast %40 : vector<1x8x1xf32> to vector<1x8x8xf32>
    %42 = arith.subf %38, %41 : vector<1x8x8xf32>
    %43 = math.exp %42 : vector<1x8x8xf32>
    %cst_15 = arith.constant dense<0.000000e+00> : vector<1x8xf32>
    %44 = vector.multi_reduction <add>, %43, %cst_15 [2] : vector<1x8x8xf32> to vector<1x8xf32>
    %45 = vector.shape_cast %44 : vector<1x8xf32> to vector<1x8x1xf32>
    %46 = tpu.reciprocal %45 {approx = true} : vector<1x8x1xf32> -> vector<1x8x1xf32>
    %47 = vector.broadcast %46 : vector<1x8x1xf32> to vector<1x8x8xf32>
    %48 = arith.mulf %43, %47 : vector<1x8x8xf32>
    %49 = arith.truncf %48 : vector<1x8x8xf32> to vector<1x8x8xbf16>
    %50 = vector.extract_strided_slice %35 {offsets = [0, 0, 0], sizes = [1, 8, 32], strides = [1, 1, 1]} : vector<1x8x128xbf16> to vector<1x8x32xbf16>
    "tpu.trace_start"() <{level = 10 : i32, message = "bqk,bkd->bqd"}> : () -> ()
    %cst_16 = arith.constant dense<0.000000e+00> : vector<1x8x32xf32>
    %51 = tpu.matmul %49, %50, %cst_16 {dimension_numbers = #tpu.dot_dimension_numbers<[2], [1], [1], [2], [0, 0, 0, 1, 1, 2], [0], [0]>} : vector<1x8x8xbf16>, vector<1x8x32xbf16>, vector<1x8x32xf32> -> vector<1x8x32xf32>
    "tpu.trace_stop"() : () -> ()
    %52 = vector.shape_cast %51 : vector<1x8x32xf32> to vector<8x32xf32>
    %53 = arith.truncf %52 : vector<8x32xf32> to vector<8x32xbf16>
    %c0_17 = arith.constant 0 : index
    %c0_18 = arith.constant 0 : index
    %54 = vector.load %arg5[%c0_17, %c0_18] : memref<128x128xbf16, #tpu.memory_space<vmem>>, vector<32x128xbf16>
    %cst_19 = arith.constant dense<0.000000e+00> : vector<8x128xf32>
    %55 = tpu.matmul %53, %54, %cst_19 {dimension_numbers = #tpu.dot_dimension_numbers<[1], [0], [0], [1], [0, 0, 1, 1], [], []>} : vector<8x32xbf16>, vector<32x128xbf16>, vector<8x128xf32> -> vector<8x128xf32>
    %56 = arith.addf %1, %55 : vector<8x128xf32>
    %57 = vector.extract_strided_slice %31 {offsets = [0, 0, 32], sizes = [1, 8, 32], strides = [1, 1, 1]} : vector<1x8x128xbf16> to vector<1x8x32xbf16>
    %58 = vector.extract_strided_slice %33 {offsets = [0, 0, 32], sizes = [1, 8, 32], strides = [1, 1, 1]} : vector<1x8x128xbf16> to vector<1x8x32xbf16>
    "tpu.trace_start"() <{level = 10 : i32, message = "bqd,bkd->bqk"}> : () -> ()
    %cst_20 = arith.constant dense<0.000000e+00> : vector<1x8x8xf32>
    %59 = tpu.matmul %57, %58, %cst_20 {dimension_numbers = #tpu.dot_dimension_numbers<[2], [2], [1], [1], [0, 0, 0, 1, 1, 1], [0], [0]>} : vector<1x8x32xbf16>, vector<1x8x32xbf16>, vector<1x8x8xf32> -> vector<1x8x8xf32>
    "tpu.trace_stop"() : () -> ()
    %cst_21 = arith.constant dense<0xFF800000> : vector<1x8xf32>
    %60 = vector.multi_reduction <maximumf>, %59, %cst_21 [2] : vector<1x8x8xf32> to vector<1x8xf32>
    %61 = vector.shape_cast %60 : vector<1x8xf32> to vector<1x8x1xf32>
    %62 = vector.broadcast %61 : vector<1x8x1xf32> to vector<1x8x8xf32>
    %63 = arith.subf %59, %62 : vector<1x8x8xf32>
    %64 = math.exp %63 : vector<1x8x8xf32>
    %cst_22 = arith.constant dense<0.000000e+00> : vector<1x8xf32>
    %65 = vector.multi_reduction <add>, %64, %cst_22 [2] : vector<1x8x8xf32> to vector<1x8xf32>
    %66 = vector.shape_cast %65 : vector<1x8xf32> to vector<1x8x1xf32>
    %67 = tpu.reciprocal %66 {approx = true} : vector<1x8x1xf32> -> vector<1x8x1xf32>
    %68 = vector.broadcast %67 : vector<1x8x1xf32> to vector<1x8x8xf32>
    %69 = arith.mulf %64, %68 : vector<1x8x8xf32>
    %70 = arith.truncf %69 : vector<1x8x8xf32> to vector<1x8x8xbf16>
    %71 = vector.extract_strided_slice %35 {offsets = [0, 0, 32], sizes = [1, 8, 32], strides = [1, 1, 1]} : vector<1x8x128xbf16> to vector<1x8x32xbf16>
    "tpu.trace_start"() <{level = 10 : i32, message = "bqk,bkd->bqd"}> : () -> ()
    %cst_23 = arith.constant dense<0.000000e+00> : vector<1x8x32xf32>
    %72 = tpu.matmul %70, %71, %cst_23 {dimension_numbers = #tpu.dot_dimension_numbers<[2], [1], [1], [2], [0, 0, 0, 1, 1, 2], [0], [0]>} : vector<1x8x8xbf16>, vector<1x8x32xbf16>, vector<1x8x32xf32> -> vector<1x8x32xf32>
    "tpu.trace_stop"() : () -> ()
    %73 = vector.shape_cast %72 : vector<1x8x32xf32> to vector<8x32xf32>
    %74 = arith.truncf %73 : vector<8x32xf32> to vector<8x32xbf16>
    %c32 = arith.constant 32 : index
    %c0_24 = arith.constant 0 : index
    %75 = vector.load %arg5[%c32, %c0_24] : memref<128x128xbf16, #tpu.memory_space<vmem>>, vector<32x128xbf16>
    %cst_25 = arith.constant dense<0.000000e+00> : vector<8x128xf32>
    %76 = tpu.matmul %74, %75, %cst_25 {dimension_numbers = #tpu.dot_dimension_numbers<[1], [0], [0], [1], [0, 0, 1, 1], [], []>} : vector<8x32xbf16>, vector<32x128xbf16>, vector<8x128xf32> -> vector<8x128xf32>
    %77 = arith.addf %56, %76 : vector<8x128xf32>
    %78 = vector.extract_strided_slice %31 {offsets = [0, 0, 64], sizes = [1, 8, 32], strides = [1, 1, 1]} : vector<1x8x128xbf16> to vector<1x8x32xbf16>
    %79 = vector.extract_strided_slice %33 {offsets = [0, 0, 64], sizes = [1, 8, 32], strides = [1, 1, 1]} : vector<1x8x128xbf16> to vector<1x8x32xbf16>
    "tpu.trace_start"() <{level = 10 : i32, message = "bqd,bkd->bqk"}> : () -> ()
    %cst_26 = arith.constant dense<0.000000e+00> : vector<1x8x8xf32>
    %80 = tpu.matmul %78, %79, %cst_26 {dimension_numbers = #tpu.dot_dimension_numbers<[2], [2], [1], [1], [0, 0, 0, 1, 1, 1], [0], [0]>} : vector<1x8x32xbf16>, vector<1x8x32xbf16>, vector<1x8x8xf32> -> vector<1x8x8xf32>
    "tpu.trace_stop"() : () -> ()
    %cst_27 = arith.constant dense<0xFF800000> : vector<1x8xf32>
    %81 = vector.multi_reduction <maximumf>, %80, %cst_27 [2] : vector<1x8x8xf32> to vector<1x8xf32>
    %82 = vector.shape_cast %81 : vector<1x8xf32> to vector<1x8x1xf32>
    %83 = vector.broadcast %82 : vector<1x8x1xf32> to vector<1x8x8xf32>
    %84 = arith.subf %80, %83 : vector<1x8x8xf32>
    %85 = math.exp %84 : vector<1x8x8xf32>
    %cst_28 = arith.constant dense<0.000000e+00> : vector<1x8xf32>
    %86 = vector.multi_reduction <add>, %85, %cst_28 [2] : vector<1x8x8xf32> to vector<1x8xf32>
    %87 = vector.shape_cast %86 : vector<1x8xf32> to vector<1x8x1xf32>
    %88 = tpu.reciprocal %87 {approx = true} : vector<1x8x1xf32> -> vector<1x8x1xf32>
    %89 = vector.broadcast %88 : vector<1x8x1xf32> to vector<1x8x8xf32>
    %90 = arith.mulf %85, %89 : vector<1x8x8xf32>
    %91 = arith.truncf %90 : vector<1x8x8xf32> to vector<1x8x8xbf16>
    %92 = vector.extract_strided_slice %35 {offsets = [0, 0, 64], sizes = [1, 8, 32], strides = [1, 1, 1]} : vector<1x8x128xbf16> to vector<1x8x32xbf16>
    "tpu.trace_start"() <{level = 10 : i32, message = "bqk,bkd->bqd"}> : () -> ()
    %cst_29 = arith.constant dense<0.000000e+00> : vector<1x8x32xf32>
    %93 = tpu.matmul %91, %92, %cst_29 {dimension_numbers = #tpu.dot_dimension_numbers<[2], [1], [1], [2], [0, 0, 0, 1, 1, 2], [0], [0]>} : vector<1x8x8xbf16>, vector<1x8x32xbf16>, vector<1x8x32xf32> -> vector<1x8x32xf32>
    "tpu.trace_stop"() : () -> ()
    %94 = vector.shape_cast %93 : vector<1x8x32xf32> to vector<8x32xf32>
    %95 = arith.truncf %94 : vector<8x32xf32> to vector<8x32xbf16>
    %c64 = arith.constant 64 : index
    %c0_30 = arith.constant 0 : index
    %96 = vector.load %arg5[%c64, %c0_30] : memref<128x128xbf16, #tpu.memory_space<vmem>>, vector<32x128xbf16>
    %cst_31 = arith.constant dense<0.000000e+00> : vector<8x128xf32>
    %97 = tpu.matmul %95, %96, %cst_31 {dimension_numbers = #tpu.dot_dimension_numbers<[1], [0], [0], [1], [0, 0, 1, 1], [], []>} : vector<8x32xbf16>, vector<32x128xbf16>, vector<8x128xf32> -> vector<8x128xf32>
    %98 = arith.addf %77, %97 : vector<8x128xf32>
    %99 = vector.extract_strided_slice %31 {offsets = [0, 0, 96], sizes = [1, 8, 32], strides = [1, 1, 1]} : vector<1x8x128xbf16> to vector<1x8x32xbf16>
    %100 = vector.extract_strided_slice %33 {offsets = [0, 0, 96], sizes = [1, 8, 32], strides = [1, 1, 1]} : vector<1x8x128xbf16> to vector<1x8x32xbf16>
    "tpu.trace_start"() <{level = 10 : i32, message = "bqd,bkd->bqk"}> : () -> ()
    %cst_32 = arith.constant dense<0.000000e+00> : vector<1x8x8xf32>
    %101 = tpu.matmul %99, %100, %cst_32 {dimension_numbers = #tpu.dot_dimension_numbers<[2], [2], [1], [1], [0, 0, 0, 1, 1, 1], [0], [0]>} : vector<1x8x32xbf16>, vector<1x8x32xbf16>, vector<1x8x8xf32> -> vector<1x8x8xf32>
    "tpu.trace_stop"() : () -> ()
    %cst_33 = arith.constant dense<0xFF800000> : vector<1x8xf32>
    %102 = vector.multi_reduction <maximumf>, %101, %cst_33 [2] : vector<1x8x8xf32> to vector<1x8xf32>
    %103 = vector.shape_cast %102 : vector<1x8xf32> to vector<1x8x1xf32>
    %104 = vector.broadcast %103 : vector<1x8x1xf32> to vector<1x8x8xf32>
    %105 = arith.subf %101, %104 : vector<1x8x8xf32>
    %106 = math.exp %105 : vector<1x8x8xf32>
    %cst_34 = arith.constant dense<0.000000e+00> : vector<1x8xf32>
    %107 = vector.multi_reduction <add>, %106, %cst_34 [2] : vector<1x8x8xf32> to vector<1x8xf32>
    %108 = vector.shape_cast %107 : vector<1x8xf32> to vector<1x8x1xf32>
    %109 = tpu.reciprocal %108 {approx = true} : vector<1x8x1xf32> -> vector<1x8x1xf32>
    %110 = vector.broadcast %109 : vector<1x8x1xf32> to vector<1x8x8xf32>
    %111 = arith.mulf %106, %110 : vector<1x8x8xf32>
    %112 = arith.truncf %111 : vector<1x8x8xf32> to vector<1x8x8xbf16>
    %113 = vector.extract_strided_slice %35 {offsets = [0, 0, 96], sizes = [1, 8, 32], strides = [1, 1, 1]} : vector<1x8x128xbf16> to vector<1x8x32xbf16>
    "tpu.trace_start"() <{level = 10 : i32, message = "bqk,bkd->bqd"}> : () -> ()
    %cst_35 = arith.constant dense<0.000000e+00> : vector<1x8x32xf32>
    %114 = tpu.matmul %112, %113, %cst_35 {dimension_numbers = #tpu.dot_dimension_numbers<[2], [1], [1], [2], [0, 0, 0, 1, 1, 2], [0], [0]>} : vector<1x8x8xbf16>, vector<1x8x32xbf16>, vector<1x8x32xf32> -> vector<1x8x32xf32>
    "tpu.trace_stop"() : () -> ()
    %115 = vector.shape_cast %114 : vector<1x8x32xf32> to vector<8x32xf32>
    %116 = arith.truncf %115 : vector<8x32xf32> to vector<8x32xbf16>
    %c96 = arith.constant 96 : index
    %c0_36 = arith.constant 0 : index
    %117 = vector.load %arg5[%c96, %c0_36] : memref<128x128xbf16, #tpu.memory_space<vmem>>, vector<32x128xbf16>
    %cst_37 = arith.constant dense<0.000000e+00> : vector<8x128xf32>
    %118 = tpu.matmul %116, %117, %cst_37 {dimension_numbers = #tpu.dot_dimension_numbers<[1], [0], [0], [1], [0, 0, 1, 1], [], []>} : vector<8x32xbf16>, vector<32x128xbf16>, vector<8x128xf32> -> vector<8x128xf32>
    %119 = arith.addf %98, %118 : vector<8x128xf32>
    %120 = vector.shape_cast %119 : vector<8x128xf32> to vector<1x8x128xf32>
    %c0_38 = arith.constant 0 : index
    %c0_39 = arith.constant 0 : index
    %c0_40 = arith.constant 0 : index
    %121 = vector.load %arg6[%c0_38, %c0_39, %c0_40] : memref<1x8x128xf32, #tpu.memory_space<vmem>>, vector<1x8x128xf32>
    tpu.vector_store %arg6[%c0_38, %c0_39, %c0_40], %120 {strides = array<i32>} : memref<1x8x128xf32, #tpu.memory_space<vmem>>, vector<1x8x128xf32>,
    return
  }
  func.func @transform_0(%arg0: i32) -> (i32, i32, i32) {
    %c0_i32 = arith.constant 0 : i32
    %c0_i32_0 = arith.constant 0 : i32
    %c0_i32_1 = arith.constant 0 : i32
    return %arg0, %c0_i32, %c0_i32_0 : i32, i32, i32
  }
  func.func @transform_1(%arg0: i32) -> (i32, i32) {
    %c0_i32 = arith.constant 0 : i32
    %c0_i32_0 = arith.constant 0 : i32
    %c0_i32_1 = arith.constant 0 : i32
    return %c0_i32, %c0_i32_0 : i32, i32
  }
  func.func @transform_2(%arg0: i32) -> (i32, i32) {
    %c0_i32 = arith.constant 0 : i32
    %c0_i32_0 = arith.constant 0 : i32
    %c0_i32_1 = arith.constant 0 : i32
    return %c0_i32, %c0_i32_0 : i32, i32
  }
  func.func @transform_3(%arg0: i32) -> (i32, i32) {
    %c0_i32 = arith.constant 0 : i32
    %c0_i32_0 = arith.constant 0 : i32
    %c0_i32_1 = arith.constant 0 : i32
    return %c0_i32, %c0_i32_0 : i32, i32
  }
  func.func @transform_4(%arg0: i32) -> (i32, i32) {
    %c0_i32 = arith.constant 0 : i32
    %c0_i32_0 = arith.constant 0 : i32
    %c0_i32_1 = arith.constant 0 : i32
    return %c0_i32, %c0_i32_0 : i32, i32
  }
  func.func @transform_5(%arg0: i32) -> (i32, i32, i32) {
    %c0_i32 = arith.constant 0 : i32
    %c0_i32_0 = arith.constant 0 : i32
    %c0_i32_1 = arith.constant 0 : i32
    return %arg0, %c0_i32, %c0_i32_0 : i32, i32, i32
  }
}

</mosaic_0001>

<llo_original>
// kernel: tpu_custom_call.1
$region0: #{tpu_custom_call.1}
  #allocation0 [shape = 'u32[]', space=smem, size = 0x4, offset = 0x4, fixed_abs, tag = 'smem constant byte address 0x4 - core index']
  #allocation1 [shape = 'u32[72,128]{1,0:T(1,128)}', space=vmem, size = 0x9000, scoped, tag = 'internal scratch']
  %s0 = inlined_call_operand.hbm [shape: f32[8,128], index: 0, kind: input, shape index: {}]
  %s1 = inlined_call_operand.hbm [shape: f32[8,128], index: 1, kind: output, shape index: {}]
  %s2 = sld [smem:[#allocation0]]
  $region18: #{tpu_custom_call.1} parent=0
    _
  %s4 = ssub.s32 1, %s2
  %s5 = scalar_select 0, %s4, %s2
  $region1: #{tpu_custom_call.1} parent=0
    #allocation2 [shape = 'u8[4096]{0}', space=vmem, size = 0x1000, scoped, tag = 'input window, operand 0, single buffered']
    #allocation3 [shape = 's32[1]{0}', space=sflag, size = 0x4, scoped, tag = 'scoped memory for tpu_custom_call.1']
    #allocation4 [shape = 's32[1]{0}', space=sflag, size = 0x4, scoped, tag = 'scoped memory for tpu_custom_call.1']
    #allocation5 [shape = 'u8[4096]{0}', space=vmem, size = 0x1000, scoped, tag = 'output window, operand 0, single buffered']
    %6 = vsyncpa [#allocation3], 0
    %7 = vsyncpa [#allocation4], 0
    // Predicated region
    $region2: #{tpu_custom_call.1} parent=1 // pred_check
      _
    $region3: #{tpu_custom_call.1} parent=1 // pred_check_branch
      %9 = sbr.rel (0) target = $region5
    $region4: #{tpu_custom_call.1} parent=1 // pred_region
      %11 = vsyncadd [#allocation3], 0
      %s13 = sshll.u32 %s0, 4
      %s14 = int_to_ptr.hbm [resolvable:$true] %s13
      %s15 = sshll.u32 [#allocation2], 4
      %s16 = int_to_ptr.vmem [resolvable:$true] %s15
      %18 = dma.hbm_to_vmem [thread:$0]  %s14, 128, %s16, [#allocation3]
    $region5: #{tpu_custom_call.1} parent=1 // pred_fallthru
      _
    // Predicated region
    $region6: #{tpu_custom_call.1} parent=1 // pred_check
      _
    $region7: #{tpu_custom_call.1} parent=1 // pred_check_branch
      %20 = sbr.rel (0) target = $region9
    $region8: #{tpu_custom_call.1} parent=1 // pred_region
      %22 = dma.done [#allocation3], 128
    $region9: #{tpu_custom_call.1} parent=1 // pred_fallthru
      _
    %v23 = vld [vmem:[#allocation2] sm:$0xff]
    %24 = vst [vmem:[#allocation5] sm:$0xff] %v23
    // Predicated region
    $region10: #{tpu_custom_call.1} parent=1 // pred_check
      _
    $region11: #{tpu_custom_call.1} parent=1 // pred_check_branch
      %26 = sbr.rel (0) target = $region13
    $region12: #{tpu_custom_call.1} parent=1 // pred_region
      %28 = vsyncadd [#allocation4], 0
      %s30 = sshll.u32 [#allocation5], 4
      %s31 = int_to_ptr.vmem [resolvable:$true] %s30
      %s32 = sshll.u32 %s1, 4
      %s33 = int_to_ptr.hbm [resolvable:$true] %s32
      %35 = dma.vmem_to_hbm [thread:$0]  %s31, 128, %s33, [#allocation4]
    $region13: #{tpu_custom_call.1} parent=1 // pred_fallthru
      _
    // Predicated region
    $region14: #{tpu_custom_call.1} parent=1 // pred_check
      _
    $region15: #{tpu_custom_call.1} parent=1 // pred_check_branch
      %37 = sbr.rel (0) target = $region17
    $region16: #{tpu_custom_call.1} parent=1 // pred_region
      %39 = dma.done [#allocation4], 128
    $region17: #{tpu_custom_call.1} parent=1 // pred_fallthru
      _
    %40 = vsyncpa [#allocation3], 1
    %41 = vsyncpa [#allocation4], 1

// kernel: tpu_custom_call.1
$region0: #{tpu_custom_call.1}
  #allocation0 [shape = 'u32[]', space=smem, size = 0x4, offset = 0x4, fixed_abs, tag = 'smem constant byte address 0x4 - core index']
  #allocation1 [shape = 'u32[72,128]{1,0:T(1,128)}', space=vmem, size = 0x9000, scoped, tag = 'internal scratch']
  %s0 = inlined_call_operand.hbm [shape: f32[2,8,128], index: 0, kind: input, shape index: {}]
  %s1 = inlined_call_operand.hbm [shape: f32[1,128], index: 1, kind: input, shape index: {}]
  %s2 = inlined_call_operand.vmem [shape: f32[1,128], index: 2, kind: input, shape index: {}]
  %s3 = inlined_call_operand.hbm [shape: bf16[128,384], index: 3, kind: input, shape index: {}]
  %s4 = inlined_call_operand.hbm [shape: bf16[128,128], index: 4, kind: input, shape index: {}]
  %s5 = inlined_call_operand.hbm [shape: f32[2,8,128], index: 5, kind: output, shape index: {}]
  %s6 = sld [smem:[#allocation0]]
  $region69: #{tpu_custom_call.1} parent=0
    _
  %s8 = ssub.s32 1, %s6
  %s9 = scalar_select 0, %s8, %s6
  $region1: #{tpu_custom_call.1} parent=0
    #allocation2 [shape = 'u8[8192]{0}', space=vmem, size = 0x2000, scoped, tag = 'input window, operand 0']
    #allocation3 [shape = 's32[2]{0}', space=sflag, size = 0x8, scoped, tag = 'scoped memory for tpu_custom_call.1']
    #allocation4 [shape = 's32[2]{0}', space=sflag, size = 0x8, scoped, tag = 'scoped memory for tpu_custom_call.1']
    #allocation5 [shape = 'u8[512]{0}', space=vmem, size = 0x400, scoped, tag = 'input window, operand 1, single buffered']
    #allocation6 [shape = 's32[1]{0}', space=sflag, size = 0x4, scoped, tag = 'scoped memory for tpu_custom_call.1']
    #allocation7 [shape = 'u8[98304]{0}', space=vmem, size = 0x18000, scoped, tag = 'input window, operand 3, single buffered']
    #allocation8 [shape = 'u8[32768]{0}', space=vmem, size = 0x8000, scoped, tag = 'input window, operand 4, single buffered']
    #allocation9 [shape = 's32[1]{0}', space=sflag, size = 0x4, scoped, tag = 'scoped memory for tpu_custom_call.1']
    #allocation10 [shape = 'u8[8192]{0}', space=vmem, size = 0x2000, scoped, tag = 'output window, operand 0']
    %10 = vsyncpa [#allocation3], 0
    %s11 = scalar_lea.sflag [#allocation3], 1
    %12 = vsyncpa %s11, 0
    %13 = vsyncpa [#allocation6], 0
    %14 = vsyncpa [#allocation9], 0
    %15 = vsyncpa [#allocation4], 0
    %s16 = scalar_lea.sflag [#allocation4], 1
    %17 = vsyncpa %s16, 0
    loop: start=0, step=1, limit=4
    $region2: #{tpu_custom_call.1} parent=1 // loop_pre_header
      _
    $region3: #{tpu_custom_call.1} parent=1 // loop_header
      %s19 = sphi 0, %s23
      %p20 = scmp.ge.s32.totalorder %s19, 4
      %s29 = sphi 0, %s31
      %s32 = sphi 0, %s29
      %s33 = sphi 0, %s32
      %s49 = sphi 0, %s33
      %s53 = sphi 0, %s53
      %s55 = sphi 0, %s53
      %s56 = sphi 0, %s55
      %s70 = sphi 0, %s56
      %s74 = sphi 0, %s74
      %s76 = sphi 0, %s74
      %s77 = sphi 0, %s76
      %s91 = sphi 0, %s77
      %s95 = sphi 0, %s95
      %s97 = sphi 0, %s95
      %s98 = sphi 0, %s97
      %s112 = sphi 0, %s98
      %s116 = sphi 0, %s116
      %s118 = sphi 0, %s116
      %s119 = sphi 0, %s118
      %s133 = sphi 0, %s119
      %s139 = sphi 0, %s141
      %s142 = sphi 0, %s139
      %s143 = sphi 0, %s142
      %s159 = sphi 0, %s143
    $region4: #{tpu_custom_call.1} parent=1 // loop_header_branch
      %22 = sbr.rel (%p20) target = $region8
    $region5: #{tpu_custom_call.1} parent=1 // loop_body
      %s24 = ssub.s32 %s19, 1
      %s25 = ssub.s32 %s19, 2
      %s26 = sadd.s32 %s19, 1
      %s27 = ssub.s32 %s19, %s26
      %p28 = scmp.eq.s32.totalorder %s27, 0
      %s30 = sadd.s32 %s29, 1
      %s31 = scalar_select %p28, %s29, %s30
      %p34 = pneg %p28
      %p35 = scmp.eq.s32.totalorder %s19, 1
      %p36 = por %p34, %p35
      %p37 = scmp.ne.s32.totalorder %s29, %s32
      %p38 = scmp.eq.s32.totalorder %s19, 0
      %p39 = por %p37, %p38
      %p40 = scmp.ne.s32.totalorder %s29, %s32
      %p41 = scmp.eq.s32.totalorder %s24, 1
      %p42 = por %p40, %p41
      %p43 = scmp.ne.s32.totalorder %s32, %s33
      %p44 = scmp.eq.s32.totalorder %s24, 0
      %p45 = por %p43, %p44
      %p46 = scmp.ne.s32.totalorder %s32, %s33
      %p47 = scmp.eq.s32.totalorder %s25, 1
      %p48 = por %p46, %p47
      %p50 = scmp.ne.s32.totalorder %s33, %s49
      %p51 = scmp.eq.s32.totalorder %s25, 0
      %p52 = por %p50, %p51
      %s54 = sadd.s32 %s53, 1
      %p57 = scmp.eq.s32.totalorder %s19, 1
      %p58 = scmp.ne.s32.totalorder %s53, %s55
      %p59 = scmp.eq.s32.totalorder %s19, 0
      %p60 = por %p58, %p59
      %p61 = scmp.ne.s32.totalorder %s53, %s55
      %p62 = scmp.eq.s32.totalorder %s24, 1
      %p63 = por %p61, %p62
      %p64 = scmp.ne.s32.totalorder %s55, %s56
      %p65 = scmp.eq.s32.totalorder %s24, 0
      %p66 = por %p64, %p65
      %p67 = scmp.ne.s32.totalorder %s55, %s56
      %p68 = scmp.eq.s32.totalorder %s25, 1
      %p69 = por %p67, %p68
      %p71 = scmp.ne.s32.totalorder %s56, %s70
      %p72 = scmp.eq.s32.totalorder %s25, 0
      %p73 = por %p71, %p72
      %s75 = sadd.s32 %s74, 1
      %p78 = scmp.eq.s32.totalorder %s19, 1
      %p79 = scmp.ne.s32.totalorder %s74, %s76
      %p80 = scmp.eq.s32.totalorder %s19, 0
      %p81 = por %p79, %p80
      %p82 = scmp.ne.s32.totalorder %s74, %s76
      %p83 = scmp.eq.s32.totalorder %s24, 1
      %p84 = por %p82, %p83
      %p85 = scmp.ne.s32.totalorder %s76, %s77
      %p86 = scmp.eq.s32.totalorder %s24, 0
      %p87 = por %p85, %p86
      %p88 = scmp.ne.s32.totalorder %s76, %s77
      %p89 = scmp.eq.s32.totalorder %s25, 1
      %p90 = por %p88, %p89
      %p92 = scmp.ne.s32.totalorder %s77, %s91
      %p93 = scmp.eq.s32.totalorder %s25, 0
      %p94 = por %p92, %p93
      %s96 = sadd.s32 %s95, 1
      %p99 = scmp.eq.s32.totalorder %s19, 1
      %p100 = scmp.ne.s32.totalorder %s95, %s97
      %p101 = scmp.eq.s32.totalorder %s19, 0
      %p102 = por %p100, %p101
      %p103 = scmp.ne.s32.totalorder %s95, %s97
      %p104 = scmp.eq.s32.totalorder %s24, 1
      %p105 = por %p103, %p104
      %p106 = scmp.ne.s32.totalorder %s97, %s98
      %p107 = scmp.eq.s32.totalorder %s24, 0
      %p108 = por %p106, %p107
      %p109 = scmp.ne.s32.totalorder %s97, %s98
      %p110 = scmp.eq.s32.totalorder %s25, 1
      %p111 = por %p109, %p110
      %p113 = scmp.ne.s32.totalorder %s98, %s112
      %p114 = scmp.eq.s32.totalorder %s25, 0
      %p115 = por %p113, %p114
      %s117 = sadd.s32 %s116, 1
      %p120 = scmp.eq.s32.totalorder %s19, 1
      %p121 = scmp.ne.s32.totalorder %s116, %s118
      %p122 = scmp.eq.s32.totalorder %s19, 0
      %p123 = por %p121, %p122
      %p124 = scmp.ne.s32.totalorder %s116, %s118
      %p125 = scmp.eq.s32.totalorder %s24, 1
      %p126 = por %p124, %p125
      %p127 = scmp.ne.s32.totalorder %s118, %s119
      %p128 = scmp.eq.s32.totalorder %s24, 0
      %p129 = por %p127, %p128
      %p130 = scmp.ne.s32.totalorder %s118, %s119
      %p131 = scmp.eq.s32.totalorder %s25, 1
      %p132 = por %p130, %p131
      %p134 = scmp.ne.s32.totalorder %s119, %s133
      %p135 = scmp.eq.s32.totalorder %s25, 0
      %p136 = por %p134, %p135
      %s137 = ssub.s32 %s19, %s26
      %p138 = scmp.eq.s32.totalorder %s137, 0
      %s140 = sadd.s32 %s139, 1
      %s141 = scalar_select %p138, %s139, %s140
      %p144 = pneg %p138
      %p145 = scmp.eq.s32.totalorder %s19, 1
      %p146 = por %p144, %p145
      %p147 = scmp.ne.s32.totalorder %s139, %s142
      %p148 = scmp.eq.s32.totalorder %s19, 0
      %p149 = por %p147, %p148
      %p150 = scmp.ne.s32.totalorder %s139, %s142
      %p151 = scmp.eq.s32.totalorder %s24, 1
      %p152 = por %p150, %p151
      %p153 = scmp.ne.s32.totalorder %s142, %s143
      %p154 = scmp.eq.s32.totalorder %s24, 0
      %p155 = por %p153, %p154
      %p156 = scmp.ne.s32.totalorder %s142, %s143
      %p157 = scmp.eq.s32.totalorder %s25, 1
      %p158 = por %p156, %p157
      %p160 = scmp.ne.s32.totalorder %s143, %s159
      %p161 = scmp.eq.s32.totalorder %s25, 0
      %p162 = por %p160, %p161
      %p163 = scmp.le.s32.totalorder 1, %s19
      %p164 = scmp.lt.s32.totalorder %s19, 3
      %p165 = pnand %p163, %p164
      %p166 = pneg %p165
      // Predicated region
      $region9: #{tpu_custom_call.1} parent=5 // pred_check
        _
      $region10: #{tpu_custom_call.1} parent=5 // pred_check_branch
        %168 = sbr.rel (%p165) target = $region12
      $region11: #{tpu_custom_call.1} parent=5 // pred_region
        %s169 = ssub.s32 %s19, 1
        // Predicated region
        $region13: #{tpu_custom_call.1} parent=11 // pred_check
          %p170 = pneg %p66
        $region14: #{tpu_custom_call.1} parent=11 // pred_check_branch
          %172 = sbr.rel (%p170) target = $region16
        $region15: #{tpu_custom_call.1} parent=11 // pred_region
          %174 = vsyncadd [#allocation6], 0
          %s176 = sshll.u32 %s1, 4
          %s177 = int_to_ptr.hbm [resolvable:$true] %s176
          %s178 = sshll.u32 [#allocation5], 4
          %s179 = int_to_ptr.vmem [resolvable:$true] %s178
          %181 = dma.hbm_to_vmem [thread:$0]  %s177, 16, %s179, [#allocation6]
        $region16: #{tpu_custom_call.1} parent=11 // pred_fallthru
          _
        // Predicated region
        $region17: #{tpu_custom_call.1} parent=11 // pred_check
          %p182 = pneg %p87
        $region18: #{tpu_custom_call.1} parent=11 // pred_check_branch
          %184 = sbr.rel (%p182) target = $region20
        $region19: #{tpu_custom_call.1} parent=11 // pred_region
          _
        $region20: #{tpu_custom_call.1} parent=11 // pred_fallthru
          _
        // Predicated region
        $region21: #{tpu_custom_call.1} parent=11 // pred_check
          %p185 = pneg %p108
        $region22: #{tpu_custom_call.1} parent=11 // pred_check_branch
          %187 = sbr.rel (%p185) target = $region24
        $region23: #{tpu_custom_call.1} parent=11 // pred_region
          %189 = vsyncadd [#allocation6], 0
          %s190 = sshll.u32 %s3, 4
          %s191 = int_to_ptr.hbm [resolvable:$true] %s190
          %s192 = sshll.u32 [#allocation7], 4
          %s193 = int_to_ptr.vmem [resolvable:$true] %s192
          %198 = dma.hbm_to_vmem [thread:$0]  %s191, 3072, %s193, [#allocation6], 192, 192, 12
        $region24: #{tpu_custom_call.1} parent=11 // pred_fallthru
          _
        // Predicated region
        $region25: #{tpu_custom_call.1} parent=11 // pred_check
          %p199 = pneg %p129
        $region26: #{tpu_custom_call.1} parent=11 // pred_check_branch
          %201 = sbr.rel (%p199) target = $region28
        $region27: #{tpu_custom_call.1} parent=11 // pred_region
          %203 = vsyncadd [#allocation9], 0
          %s204 = sshll.u32 %s4, 4
          %s205 = int_to_ptr.hbm [resolvable:$true] %s204
          %s206 = sshll.u32 [#allocation8], 4
          %s207 = int_to_ptr.vmem [resolvable:$true] %s206
          %212 = dma.hbm_to_vmem [thread:$0]  %s205, 1024, %s207, [#allocation9], 64, 64, 4
        $region28: #{tpu_custom_call.1} parent=11 // pred_fallthru
          _
      $region12: #{tpu_custom_call.1} parent=5 // pred_fallthru
        _
      %p213 = scmp.lt.s32.totalorder %s19, 2
      // Predicated region
      $region29: #{tpu_custom_call.1} parent=5 // pred_check
        %p214 = pneg %p213
      $region30: #{tpu_custom_call.1} parent=5 // pred_check_branch
        %216 = sbr.rel (%p214) target = $region32
      $region31: #{tpu_custom_call.1} parent=5 // pred_region
        // Predicated region
        $region33: #{tpu_custom_call.1} parent=31 // pred_check
          %p217 = pneg %p39
        $region34: #{tpu_custom_call.1} parent=31 // pred_check_branch
          %219 = sbr.rel (%p217) target = $region36
        $region35: #{tpu_custom_call.1} parent=31 // pred_region
          %s220 = sand.u32 %s29, 1
          %s221 = scalar_lea.sflag [#allocation3], %s220
          %s222 = sand.u32 %s29, 1
          %s223 = smul.addr %s222, 8
          %s224 = scalar_lea.vmem [#allocation2], %s223
          %226 = vsyncadd %s221, 0
          %s227 = smul.addr %s19, 8
          %s228 = scalar_lea.hbm %s0, %s227
          %s230 = sshll.u32 %s228, 4
          %s231 = int_to_ptr.hbm [resolvable:$true] %s230
          %s232 = sshll.u32 %s224, 4
          %s233 = int_to_ptr.vmem [resolvable:$true] %s232
          %235 = dma.hbm_to_vmem [thread:$0]  %s231, 128, %s233, %s221
        $region36: #{tpu_custom_call.1} parent=31 // pred_fallthru
          _
      $region32: #{tpu_custom_call.1} parent=5 // pred_fallthru
        _
      %p236 = scmp.le.s32.totalorder 1, %s19
      %p237 = scmp.lt.s32.totalorder %s19, 3
      %p238 = pnand %p236, %p237
      %p239 = pneg %p238
      // Predicated region
      $region37: #{tpu_custom_call.1} parent=5 // pred_check
        _
      $region38: #{tpu_custom_call.1} parent=5 // pred_check_branch
        %241 = sbr.rel (%p238) target = $region40
      $region39: #{tpu_custom_call.1} parent=5 // pred_region
        %s242 = ssub.s32 %s19, 1
        %s243 = sand.u32 %s32, 1
        %s244 = scalar_lea.sflag [#allocation3], %s243
        %s245 = sand.u32 %s32, 1
        %s246 = smul.addr %s245, 8
        %s247 = scalar_lea.vmem [#allocation2], %s246
        // Predicated region
        $region41: #{tpu_custom_call.1} parent=39 // pred_check
          %p248 = pneg %p45
        $region42: #{tpu_custom_call.1} parent=39 // pred_check_branch
          %250 = sbr.rel (%p248) target = $region44
        $region43: #{tpu_custom_call.1} parent=39 // pred_region
          %252 = dma.done %s244, 128
        $region44: #{tpu_custom_call.1} parent=39 // pred_fallthru
          _
        // Predicated region
        $region45: #{tpu_custom_call.1} parent=39 // pred_check
          %p253 = pneg %p66
        $region46: #{tpu_custom_call.1} parent=39 // pred_check_branch
          %255 = sbr.rel (%p253) target = $region48
        $region47: #{tpu_custom_call.1} parent=39 // pred_region
          %257 = dma.done [#allocation6], 16
        $region48: #{tpu_custom_call.1} parent=39 // pred_fallthru
          _
        // Predicated region
        $region49: #{tpu_custom_call.1} parent=39 // pred_check
          %p258 = pneg %p108
        $region50: #{tpu_custom_call.1} parent=39 // pred_check_branch
          %260 = sbr.rel (%p258) target = $region52
        $region51: #{tpu_custom_call.1} parent=39 // pred_region
          %262 = dma.done [#allocation6], 3072
        $region52: #{tpu_custom_call.1} parent=39 // pred_fallthru
          _
        // Predicated region
        $region53: #{tpu_custom_call.1} parent=39 // pred_check
          %p263 = pneg %p129
        $region54: #{tpu_custom_call.1} parent=39 // pred_check_branch
          %265 = sbr.rel (%p263) target = $region56
        $region55: #{tpu_custom_call.1} parent=39 // pred_region
          %267 = dma.done [#allocation9], 1024
        $region56: #{tpu_custom_call.1} parent=39 // pred_fallthru
          _
        %s268 = sand.u32 %s32, 1
        %s269 = scalar_lea.sflag [#allocation3], %s268
        %s270 = sand.u32 %s32, 1
        %s271 = smul.addr %s270, 8
        %s272 = scalar_lea.vmem [#allocation2], %s271
        %p273 = pneg %p45
        %p274 = pneg %p42
        %p275 = pneg %p66
        %p276 = pneg %p63
        %p277 = pneg %p87
        %p278 = pneg %p84
        %p279 = pneg %p108
        %p280 = pneg %p105
        %p281 = pneg %p129
        %p282 = pneg %p126
        %p283 = pneg %p155
        %p284 = pneg %p152
        %s285 = sand.u32 %s142, 1
        %s286 = scalar_lea.sflag [#allocation4], %s285
        %s287 = sand.u32 %s142, 1
        %s288 = smul.addr %s287, 8
        %s289 = scalar_lea.vmem [#allocation10], %s288
        %v291 = vld [vmem:[%s247] sm:$0xff]
        %v292 = vld [vmem:[#allocation5] sm:$0x1]
        %v293 = vld [vmem:[%s2] sm:$0x1]
        %294 = vadd.xlane.f32.xlu0 %v291
        %v295 = vpop.xlane.xlu0 %294
        %v296 = vrcp.pop 128.0
        %v297 = vmul.f32 128.0, %v296
        %v298 = vsub.f32 1.0, %v297
        %v299 = vmul.f32 %v296, %v298
        %v300 = vadd.f32 %v296, %v299
        %vm301 = vweird.f32 %v296
        %v302 = vsel %vm301, %v296, %v300
        %v303 = vmul.f32 %v295, %v302
        %v304 = vsub.f32 %v291, %v303
        %v305 = vmul.f32 %v304, %v304
        %306 = vadd.xlane.f32.xlu0 %v305
        %v307 = vpop.xlane.xlu0 %306
        %v308 = vmul.f32 %v307, %v302
        %v309 = vadd.f32 %v308, 1e-05
        %v310 = vrsqrt.pop %v309
        %v311 = vmul.f32 %v310, %v309
        %v312 = vmul.f32 %v311, %v310
        %v313 = vmul.f32 0.5, %v312
        %v314 = vsub.f32 1.5, %v313
        %v315 = vmul.f32 %v310, %v314
        %vm316 = vweird.f32 %v309
        %vm317 = vweird.f32 %v310
        %vm318 = vmor %vm316, %vm317
        %v319 = vsel %vm318, %v310, %v315
        %v320 = vmul.f32 %v304, %v319
        %v322 = vperm.slane %v292, 0
        %v324 = vmul.f32 %v320, %v322
        %v326 = vperm.slane %v293, 0
        %v328 = vadd.f32 %v324, %v326
        %v329 = vpack.c.bf16 %v328, %v328
        %v330 = vld [vmem:[#allocation7] sm:$0xff]
        %v331 = vld [vmem:[#allocation7 + $0x8] sm:$0xf]
        %v332 = vld [vmem:[#allocation7 + $0xc] sm:$0xff]
        %v333 = vld [vmem:[#allocation7 + $0x14] sm:$0xf]
        %v334 = vld [vmem:[#allocation7 + $0x18] sm:$0xff]
        %v335 = vld [vmem:[#allocation7 + $0x20] sm:$0xf]
        %v336 = vld [vmem:[#allocation7 + $0x24] sm:$0xff]
        %v337 = vld [vmem:[#allocation7 + $0x2c] sm:$0xf]
        %v338 = vld [vmem:[#allocation7 + $0x30] sm:$0xff]
        %v339 = vld [vmem:[#allocation7 + $0x38] sm:$0xf]
        %v340 = vld [vmem:[#allocation7 + $0x3c] sm:$0xff]
        %v341 = vld [vmem:[#allocation7 + $0x44] sm:$0xf]
        %v342 = vld [vmem:[#allocation7 + $0x48] sm:$0xff]
        %v343 = vld [vmem:[#allocation7 + $0x50] sm:$0xf]
        %v344 = vld [vmem:[#allocation7 + $0x54] sm:$0xff]
        %v345 = vld [vmem:[#allocation7 + $0x5c] sm:$0xf]
        %v346 = vld [vmem:[#allocation7 + $0x60] sm:$0xff]
        %v347 = vld [vmem:[#allocation7 + $0x68] sm:$0xf]
        %v348 = vld [vmem:[#allocation7 + $0x6c] sm:$0xff]
        %v349 = vld [vmem:[#allocation7 + $0x74] sm:$0xf]
        %v350 = vld [vmem:[#allocation7 + $0x78] sm:$0xff]
        %v351 = vld [vmem:[#allocation7 + $0x80] sm:$0xf]
        %v352 = vld [vmem:[#allocation7 + $0x84] sm:$0xff]
        %v353 = vld [vmem:[#allocation7 + $0x8c] sm:$0xf]
        %v354 = vld [vmem:[#allocation7 + $0x90] sm:$0xff]
        %v355 = vld [vmem:[#allocation7 + $0x98] sm:$0xf]
        %v356 = vld [vmem:[#allocation7 + $0x9c] sm:$0xff]
        %v357 = vld [vmem:[#allocation7 + $0xa4] sm:$0xf]
        %v358 = vld [vmem:[#allocation7 + $0xa8] sm:$0xff]
        %v359 = vld [vmem:[#allocation7 + $0xb0] sm:$0xf]
        %v360 = vld [vmem:[#allocation7 + $0xb4] sm:$0xff]
        %v361 = vld [vmem:[#allocation7 + $0xbc] sm:$0xf]
        %v394 = vunpack.c.l.b16 %v330
        %v395 = vunpack.c.h.b16 %v330
        %v396 = vunpack.c.l.b16 %v331
        %v397 = vunpack.c.l.b16 %v332
        %v398 = vunpack.c.h.b16 %v332
        %v399 = vunpack.c.l.b16 %v333
        %v400 = vunpack.c.l.b16 %v334
        %v401 = vunpack.c.h.b16 %v334
        %v402 = vunpack.c.l.b16 %v335
        %v403 = vunpack.c.l.b16 %v336
        %v404 = vunpack.c.h.b16 %v336
        %v405 = vunpack.c.l.b16 %v337
        %v406 = vunpack.c.l.b16 %v338
        %v407 = vunpack.c.h.b16 %v338
        %v408 = vunpack.c.l.b16 %v339
        %v409 = vunpack.c.l.b16 %v340
        %v410 = vunpack.c.h.b16 %v340
        %v411 = vunpack.c.l.b16 %v341
        %v412 = vunpack.c.l.b16 %v342
        %v413 = vunpack.c.h.b16 %v342
        %v414 = vunpack.c.l.b16 %v343
        %v415 = vunpack.c.l.b16 %v344
        %v416 = vunpack.c.h.b16 %v344
        %v417 = vunpack.c.l.b16 %v345
        %v418 = vunpack.c.l.b16 %v346
        %v419 = vunpack.c.h.b16 %v346
        %v420 = vunpack.c.l.b16 %v347
        %v421 = vunpack.c.l.b16 %v348
        %v422 = vunpack.c.h.b16 %v348
        %v423 = vunpack.c.l.b16 %v349
        %v424 = vunpack.c.l.b16 %v350
        %v425 = vunpack.c.h.b16 %v350
        %v426 = vunpack.c.l.b16 %v351
        %v427 = vunpack.c.l.b16 %v352
        %v428 = vunpack.c.h.b16 %v352
        %v429 = vunpack.c.l.b16 %v353
        %v430 = vunpack.c.l.b16 %v354
        %v431 = vunpack.c.h.b16 %v354
        %v432 = vunpack.c.l.b16 %v355
        %v433 = vunpack.c.l.b16 %v356
        %v434 = vunpack.c.h.b16 %v356
        %v435 = vunpack.c.l.b16 %v357
        %v436 = vunpack.c.l.b16 %v358
        %v437 = vunpack.c.h.b16 %v358
        %v438 = vunpack.c.l.b16 %v359
        %v439 = vunpack.c.l.b16 %v360
        %v440 = vunpack.c.h.b16 %v360
        %v441 = vunpack.c.l.b16 %v361
        %v442 = vpack.c.b16 %v397, %v394
        %v443 = vpack.c.b16 %v398, %v395
        %v444 = vpack.c.b16 %v399, %v396
        %v445 = vpack.c.b16 %v403, %v400
        %v446 = vpack.c.b16 %v404, %v401
        %v447 = vpack.c.b16 %v405, %v402
        %v448 = vpack.c.b16 %v409, %v406
        %v449 = vpack.c.b16 %v410, %v407
        %v450 = vpack.c.b16 %v411, %v408
        %v451 = vpack.c.b16 %v415, %v412
        %v452 = vpack.c.b16 %v416, %v413
        %v453 = vpack.c.b16 %v417, %v414
        %v454 = vpack.c.b16 %v421, %v418
        %v455 = vpack.c.b16 %v422, %v419
        %v456 = vpack.c.b16 %v423, %v420
        %v457 = vpack.c.b16 %v427, %v424
        %v458 = vpack.c.b16 %v428, %v425
        %v459 = vpack.c.b16 %v429, %v426
        %v460 = vpack.c.b16 %v433, %v430
        %v461 = vpack.c.b16 %v434, %v431
        %v462 = vpack.c.b16 %v435, %v432
        %v463 = vpack.c.b16 %v439, %v436
        %v464 = vpack.c.b16 %v440, %v437
        %v465 = vpack.c.b16 %v441, %v438
        %490 = vmatpush.bf16.msra.mxu0 %v463
        %491 = vmatpush.bf16.msra.mxu0 %v460
        %492 = vmatpush.bf16.msra.mxu0 %v457
        %493 = vmatpush.bf16.msra.mxu0 %v454
        %494 = vmatpush.bf16.msra.mxu0 %v451
        %495 = vmatpush.bf16.msra.mxu0 %v448
        %496 = vmatpush.bf16.msra.mxu0 %v445
        %497 = vmatpush.bf16.msra.mxu0 %v442
        %498 = vmatmul.bf16.gmra.mxu0 %v329
        %v499 = vpop.f32.mrf.mxu0
        %v500 = vadd.f32 0.0, %v499
        %v501 = vpop.f32.mrf.mxu0
        %502 = vdwg.mxu0
        %503 = vmatpush.bf16.msra.mxu0 %v464
        %504 = vmatpush.bf16.msra.mxu0 %v461
        %505 = vmatpush.bf16.msra.mxu0 %v458
        %506 = vmatpush.bf16.msra.mxu0 %v455
        %507 = vmatpush.bf16.msra.mxu0 %v452
        %508 = vmatpush.bf16.msra.mxu0 %v449
        %509 = vmatpush.bf16.msra.mxu0 %v446
        %510 = vmatpush.bf16.msra.mxu0 %v443
        %511 = vmatmul.bf16.gmra.mxu0 %v329
        %v512 = vpop.f32.mrf.mxu0
        %v513 = vadd.f32 0.0, %v512
        %v514 = vpop.f32.mrf.mxu0
        %515 = vdwg.mxu0
        %516 = vmatpush.bf16.msra.mxu0 %v465
        %517 = vmatpush.bf16.msra.mxu0 %v462
        %518 = vmatpush.bf16.msra.mxu0 %v459
        %519 = vmatpush.bf16.msra.mxu0 %v456
        %520 = vmatpush.bf16.msra.mxu0 %v453
        %521 = vmatpush.bf16.msra.mxu0 %v450
        %522 = vmatpush.bf16.msra.mxu0 %v447
        %523 = vmatpush.bf16.msra.mxu0 %v444
        %524 = vmatmul.bf16.gmra.mxu0 %v329
        %v525 = vpop.f32.mrf.mxu0
        %v526 = vadd.f32 0.0, %v525
        %v527 = vpop.f32.mrf.mxu0
        %528 = vdwg.mxu0
        %v529 = vpack.c.bf16 %v513, %v500
        %v530 = vpack.c.bf16 %v526, %v526
        %v532 = vrot.slane %v529, 4
        %vm533 = vcmask 261120
        %v535 = vsel %vm533, %v529, 0
        %v538 = vsel %vm533, %v532, 0
        %540 = vmatpush.bf16.xpose.msra.mxu0 0
        %541 = vmatpush.bf16.xpose.msra.mxu0 0
        %542 = vmatpush.bf16.xpose.msra.mxu0 0
        %543 = vmatpush.bf16.xpose.msra.mxu0 0
        %544 = vmatpush.bf16.xpose.msra.mxu0 0
        %545 = vmatpush.bf16.xpose.msra.mxu0 0
        %546 = vmatpush.bf16.xpose.msra.mxu0 0
        %547 = vmatpush.bf16.xpose.msra.mxu0 %v538
        %548 = vmatmul.bf16.gmra.mxu0 %v535
        %v549 = vpop.f32.mrf.mxu0
        %v550 = vadd.f32 0.0, %v549
        %v551 = vpop.f32.mrf.mxu0
        %552 = vdwg.mxu0
        %vm553 = vcmask 64512
        %v554 = vsel %vm553, %v550, -inf
        %555 = vmax.xlane.f32.xlu0 %v554
        %v556 = vpop.xlane.xlu0 %555
        %v557 = vsub.f32 %v550, %v556
        %v558 = vmul.f32 %v557, 1.442695
        %v559 = vpow.pop %v558
        %v560 = vsel %vm553, %v559, 0.0
        %561 = vadd.xlane.f32.xlu0 %v560
        %v562 = vpop.xlane.xlu0 %561
        %v563 = vrcp.pop %v562
        %v564 = vmul.f32 %v559, %v563
        %v565 = vpack.c.bf16 %v564, %v564
        %v567 = vsel %vm553, %v565, 0
        %vm569 = vcmask 1043456
        %v571 = vsel %vm569, %v530, 0
        %573 = vmatpush.bf16.msra.mxu0 0
        %574 = vmatpush.bf16.msra.mxu0 0
        %575 = vmatpush.bf16.msra.mxu0 0
        %576 = vmatpush.bf16.msra.mxu0 0
        %577 = vmatpush.bf16.msra.mxu0 0
        %578 = vmatpush.bf16.msra.mxu0 0
        %579 = vmatpush.bf16.msra.mxu0 0
        %580 = vmatpush.bf16.msra.mxu0 %v571
        %581 = vmatmul.bf16.gmra.mxu0 %v567
        %v582 = vpop.f32.mrf.mxu0
        %v583 = vadd.f32 0.0, %v582
        %v584 = vpop.f32.mrf.mxu0
        %585 = vdwg.mxu0
        %v586 = vpack.c.bf16 %v583, %v583
        %v587 = vld [vmem:[#allocation8] sm:$0xf]
        %v588 = vld [vmem:[#allocation8 + $0x4] sm:$0xf]
        %v589 = vld [vmem:[#allocation8 + $0x8] sm:$0xf]
        %v590 = vld [vmem:[#allocation8 + $0xc] sm:$0xf]
        %v595 = vunpack.c.l.b16 %v587
        %v596 = vunpack.c.l.b16 %v588
        %v597 = vunpack.c.l.b16 %v589
        %v598 = vunpack.c.l.b16 %v590
        %v599 = vpack.c.b16 %v596, %v595
        %v600 = vpack.c.b16 %v598, %v597
        %v604 = vsel %vm533, %v586, 0
        %606 = vmatpush.bf16.msra.mxu0 0
        %607 = vmatpush.bf16.msra.mxu0 0
        %608 = vmatpush.bf16.msra.mxu0 0
        %609 = vmatpush.bf16.msra.mxu0 0
        %610 = vmatpush.bf16.msra.mxu0 0
        %611 = vmatpush.bf16.msra.mxu0 0
        %612 = vmatpush.bf16.msra.mxu0 %v600
        %613 = vmatpush.bf16.msra.mxu0 %v599
        %614 = vmatmul.bf16.gmra.mxu0 %v604
        %v615 = vpop.f32.mrf.mxu0
        %v616 = vadd.f32 0.0, %v615
        %v617 = vpop.f32.mrf.mxu0
        %618 = vdwg.mxu0
        %v619 = vadd.f32 %v291, %v616
        %v620 = vunpack.c.l.b16 %v529
        %v621 = vpack.c.b16 %v620, %v620
        %622 = vrot.lane.b32.xlu0 %v621, 96
        %v623 = vpop.permute.xlu0 %622
        %v624 = vunpack.c.l.b16 %v532
        %v625 = vpack.c.b16 %v624, %v624
        %626 = vrot.lane.b32.xlu0 %v625, 96
        %v627 = vpop.permute.xlu0 %626
        %v629 = vsel %vm533, %v623, 0
        %v632 = vsel %vm533, %v627, 0
        %634 = vmatpush.bf16.xpose.msra.mxu0 0
        %635 = vmatpush.bf16.xpose.msra.mxu0 0
        %636 = vmatpush.bf16.xpose.msra.mxu0 0
        %637 = vmatpush.bf16.xpose.msra.mxu0 0
        %638 = vmatpush.bf16.xpose.msra.mxu0 0
        %639 = vmatpush.bf16.xpose.msra.mxu0 0
        %640 = vmatpush.bf16.xpose.msra.mxu0 0
        %641 = vmatpush.bf16.xpose.msra.mxu0 %v632
        %642 = vmatmul.bf16.gmra.mxu0 %v629
        %v643 = vpop.f32.mrf.mxu0
        %v644 = vadd.f32 0.0, %v643
        %v645 = vpop.f32.mrf.mxu0
        %646 = vdwg.mxu0
        %v647 = vsel %vm553, %v644, -inf
        %648 = vmax.xlane.f32.xlu0 %v647
        %v649 = vpop.xlane.xlu0 %648
        %v650 = vsub.f32 %v644, %v649
        %v651 = vmul.f32 %v650, 1.442695
        %v652 = vpow.pop %v651
        %v653 = vsel %vm553, %v652, 0.0
        %654 = vadd.xlane.f32.xlu0 %v653
        %v655 = vpop.xlane.xlu0 %654
        %v656 = vrcp.pop %v655
        %v657 = vmul.f32 %v652, %v656
        %v658 = vpack.c.bf16 %v657, %v657
        %v660 = vunpack.c.l.b16 %v530
        %v661 = vpack.c.b16 %v660, %v660
        %662 = vrot.lane.b32.xlu0 %v661, 96
        %v663 = vpop.permute.xlu0 %662
        %v665 = vsel %vm553, %v658, 0
        %v668 = vsel %vm569, %v663, 0
        %670 = vmatpush.bf16.msra.mxu0 0
        %671 = vmatpush.bf16.msra.mxu0 0
        %672 = vmatpush.bf16.msra.mxu0 0
        %673 = vmatpush.bf16.msra.mxu0 0
        %674 = vmatpush.bf16.msra.mxu0 0
        %675 = vmatpush.bf16.msra.mxu0 0
        %676 = vmatpush.bf16.msra.mxu0 0
        %677 = vmatpush.bf16.msra.mxu0 %v668
        %678 = vmatmul.bf16.gmra.mxu0 %v665
        %v679 = vpop.f32.mrf.mxu0
        %v680 = vadd.f32 0.0, %v679
        %v681 = vpop.f32.mrf.mxu0
        %682 = vdwg.mxu0
        %v683 = vpack.c.bf16 %v680, %v680
        %v684 = vld [vmem:[#allocation8 + $0x10] sm:$0xf]
        %v685 = vld [vmem:[#allocation8 + $0x14] sm:$0xf]
        %v686 = vld [vmem:[#allocation8 + $0x18] sm:$0xf]
        %v687 = vld [vmem:[#allocation8 + $0x1c] sm:$0xf]
        %v692 = vunpack.c.l.b16 %v684
        %v693 = vunpack.c.l.b16 %v685
        %v694 = vunpack.c.l.b16 %v686
        %v695 = vunpack.c.l.b16 %v687
        %v696 = vpack.c.b16 %v693, %v692
        %v697 = vpack.c.b16 %v695, %v694
        %v701 = vsel %vm533, %v683, 0
        %703 = vmatpush.bf16.msra.mxu0 0
        %704 = vmatpush.bf16.msra.mxu0 0
        %705 = vmatpush.bf16.msra.mxu0 0
        %706 = vmatpush.bf16.msra.mxu0 0
        %707 = vmatpush.bf16.msra.mxu0 0
        %708 = vmatpush.bf16.msra.mxu0 0
        %709 = vmatpush.bf16.msra.mxu0 %v697
        %710 = vmatpush.bf16.msra.mxu0 %v696
        %711 = vmatmul.bf16.gmra.mxu0 %v701
        %v712 = vpop.f32.mrf.mxu0
        %v713 = vadd.f32 0.0, %v712
        %v714 = vpop.f32.mrf.mxu0
        %715 = vdwg.mxu0
        %v716 = vadd.f32 %v619, %v713
        %717 = vrot.lane.b32.xlu0 %v621, 64
        %v718 = vpop.permute.xlu0 %717
        %719 = vrot.lane.b32.xlu0 %v625, 64
        %v720 = vpop.permute.xlu0 %719
        %v722 = vsel %vm533, %v718, 0
        %v725 = vsel %vm533, %v720, 0
        %727 = vmatpush.bf16.xpose.msra.mxu0 0
        %728 = vmatpush.bf16.xpose.msra.mxu0 0
        %729 = vmatpush.bf16.xpose.msra.mxu0 0
        %730 = vmatpush.bf16.xpose.msra.mxu0 0
        %731 = vmatpush.bf16.xpose.msra.mxu0 0
        %732 = vmatpush.bf16.xpose.msra.mxu0 0
        %733 = vmatpush.bf16.xpose.msra.mxu0 0
        %734 = vmatpush.bf16.xpose.msra.mxu0 %v725
        %735 = vmatmul.bf16.gmra.mxu0 %v722
        %v736 = vpop.f32.mrf.mxu0
        %v737 = vadd.f32 0.0, %v736
        %v738 = vpop.f32.mrf.mxu0
        %739 = vdwg.mxu0
        %v740 = vsel %vm553, %v737, -inf
        %741 = vmax.xlane.f32.xlu0 %v740
        %v742 = vpop.xlane.xlu0 %741
        %v743 = vsub.f32 %v737, %v742
        %v744 = vmul.f32 %v743, 1.442695
        %v745 = vpow.pop %v744
        %v746 = vsel %vm553, %v745, 0.0
        %747 = vadd.xlane.f32.xlu0 %v746
        %v748 = vpop.xlane.xlu0 %747
        %v749 = vrcp.pop %v748
        %v750 = vmul.f32 %v745, %v749
        %v751 = vpack.c.bf16 %v750, %v750
        %752 = vrot.lane.b32.xlu0 %v661, 64
        %v753 = vpop.permute.xlu0 %752
        %v755 = vsel %vm553, %v751, 0
        %v758 = vsel %vm569, %v753, 0
        %760 = vmatpush.bf16.msra.mxu0 0
        %761 = vmatpush.bf16.msra.mxu0 0
        %762 = vmatpush.bf16.msra.mxu0 0
        %763 = vmatpush.bf16.msra.mxu0 0
        %764 = vmatpush.bf16.msra.mxu0 0
        %765 = vmatpush.bf16.msra.mxu0 0
        %766 = vmatpush.bf16.msra.mxu0 0
        %767 = vmatpush.bf16.msra.mxu0 %v758
        %768 = vmatmul.bf16.gmra.mxu0 %v755
        %v769 = vpop.f32.mrf.mxu0
        %v770 = vadd.f32 0.0, %v769
        %v771 = vpop.f32.mrf.mxu0
        %772 = vdwg.mxu0
        %v773 = vpack.c.bf16 %v770, %v770
        %v774 = vld [vmem:[#allocation8 + $0x20] sm:$0xf]
        %v775 = vld [vmem:[#allocation8 + $0x24] sm:$0xf]
        %v776 = vld [vmem:[#allocation8 + $0x28] sm:$0xf]
        %v777 = vld [vmem:[#allocation8 + $0x2c] sm:$0xf]
        %v782 = vunpack.c.l.b16 %v774
        %v783 = vunpack.c.l.b16 %v775
        %v784 = vunpack.c.l.b16 %v776
        %v785 = vunpack.c.l.b16 %v777
        %v786 = vpack.c.b16 %v783, %v782
        %v787 = vpack.c.b16 %v785, %v784
        %v791 = vsel %vm533, %v773, 0
        %793 = vmatpush.bf16.msra.mxu0 0
        %794 = vmatpush.bf16.msra.mxu0 0
        %795 = vmatpush.bf16.msra.mxu0 0
        %796 = vmatpush.bf16.msra.mxu0 0
        %797 = vmatpush.bf16.msra.mxu0 0
        %798 = vmatpush.bf16.msra.mxu0 0
        %799 = vmatpush.bf16.msra.mxu0 %v787
        %800 = vmatpush.bf16.msra.mxu0 %v786
        %801 = vmatmul.bf16.gmra.mxu0 %v791
        %v802 = vpop.f32.mrf.mxu0
        %v803 = vadd.f32 0.0, %v802
        %v804 = vpop.f32.mrf.mxu0
        %805 = vdwg.mxu0
        %v806 = vadd.f32 %v716, %v803
        %807 = vrot.lane.b32.xlu0 %v621, 32
        %v808 = vpop.permute.xlu0 %807
        %809 = vrot.lane.b32.xlu0 %v625, 32
        %v810 = vpop.permute.xlu0 %809
        %v812 = vsel %vm533, %v808, 0
        %v815 = vsel %vm533, %v810, 0
        %817 = vmatpush.bf16.xpose.msra.mxu0 0
        %818 = vmatpush.bf16.xpose.msra.mxu0 0
        %819 = vmatpush.bf16.xpose.msra.mxu0 0
        %820 = vmatpush.bf16.xpose.msra.mxu0 0
        %821 = vmatpush.bf16.xpose.msra.mxu0 0
        %822 = vmatpush.bf16.xpose.msra.mxu0 0
        %823 = vmatpush.bf16.xpose.msra.mxu0 0
        %824 = vmatpush.bf16.xpose.msra.mxu0 %v815
        %825 = vmatmul.bf16.gmra.mxu0 %v812
        %v826 = vpop.f32.mrf.mxu0
        %v827 = vadd.f32 0.0, %v826
        %v828 = vpop.f32.mrf.mxu0
        %829 = vdwg.mxu0
        %v830 = vsel %vm553, %v827, -inf
        %831 = vmax.xlane.f32.xlu0 %v830
        %v832 = vpop.xlane.xlu0 %831
        %v833 = vsub.f32 %v827, %v832
        %v834 = vmul.f32 %v833, 1.442695
        %v835 = vpow.pop %v834
        %v836 = vsel %vm553, %v835, 0.0
        %837 = vadd.xlane.f32.xlu0 %v836
        %v838 = vpop.xlane.xlu0 %837
        %v839 = vrcp.pop %v838
        %v840 = vmul.f32 %v835, %v839
        %v841 = vpack.c.bf16 %v840, %v840
        %842 = vrot.lane.b32.xlu0 %v661, 32
        %v843 = vpop.permute.xlu0 %842
        %v845 = vsel %vm553, %v841, 0
        %v848 = vsel %vm569, %v843, 0
        %850 = vmatpush.bf16.msra.mxu0 0
        %851 = vmatpush.bf16.msra.mxu0 0
        %852 = vmatpush.bf16.msra.mxu0 0
        %853 = vmatpush.bf16.msra.mxu0 0
        %854 = vmatpush.bf16.msra.mxu0 0
        %855 = vmatpush.bf16.msra.mxu0 0
        %856 = vmatpush.bf16.msra.mxu0 0
        %857 = vmatpush.bf16.msra.mxu0 %v848
        %858 = vmatmul.bf16.gmra.mxu0 %v845
        %v859 = vpop.f32.mrf.mxu0
        %v860 = vadd.f32 0.0, %v859
        %v861 = vpop.f32.mrf.mxu0
        %862 = vdwg.mxu0
        %v863 = vpack.c.bf16 %v860, %v860
        %v864 = vld [vmem:[#allocation8 + $0x30] sm:$0xf]
        %v865 = vld [vmem:[#allocation8 + $0x34] sm:$0xf]
        %v866 = vld [vmem:[#allocation8 + $0x38] sm:$0xf]
        %v867 = vld [vmem:[#allocation8 + $0x3c] sm:$0xf]
        %v872 = vunpack.c.l.b16 %v864
        %v873 = vunpack.c.l.b16 %v865
        %v874 = vunpack.c.l.b16 %v866
        %v875 = vunpack.c.l.b16 %v867
        %v876 = vpack.c.b16 %v873, %v872
        %v877 = vpack.c.b16 %v875, %v874
        %v881 = vsel %vm533, %v863, 0
        %883 = vmatpush.bf16.msra.mxu0 0
        %884 = vmatpush.bf16.msra.mxu0 0
        %885 = vmatpush.bf16.msra.mxu0 0
        %886 = vmatpush.bf16.msra.mxu0 0
        %887 = vmatpush.bf16.msra.mxu0 0
        %888 = vmatpush.bf16.msra.mxu0 0
        %889 = vmatpush.bf16.msra.mxu0 %v877
        %890 = vmatpush.bf16.msra.mxu0 %v876
        %891 = vmatmul.bf16.gmra.mxu0 %v881
        %v892 = vpop.f32.mrf.mxu0
        %v893 = vadd.f32 0.0, %v892
        %v894 = vpop.f32.mrf.mxu0
        %895 = vdwg.mxu0
        %v896 = vadd.f32 %v806, %v893
        %897 = vst [vmem:[%s289] sm:$0xff] %v896
        %s898 = sand.u32 %s142, 1
        %s899 = scalar_lea.sflag [#allocation4], %s898
        %s900 = sand.u32 %s142, 1
        %s901 = smul.addr %s900, 8
        %s902 = scalar_lea.vmem [#allocation10], %s901
        // Predicated region
        $region57: #{tpu_custom_call.1} parent=39 // pred_check
          %p903 = pneg %p152
        $region58: #{tpu_custom_call.1} parent=39 // pred_check_branch
          %905 = sbr.rel (%p903) target = $region60
        $region59: #{tpu_custom_call.1} parent=39 // pred_region
          %907 = vsyncadd %s899, 0
          %s908 = smul.addr %s24, 8
          %s909 = scalar_lea.hbm %s5, %s908
          %s911 = sshll.u32 %s902, 4
          %s912 = int_to_ptr.vmem [resolvable:$true] %s911
          %s913 = sshll.u32 %s909, 4
          %s914 = int_to_ptr.hbm [resolvable:$true] %s913
          %916 = dma.vmem_to_hbm [thread:$0]  %s912, 128, %s914, %s899
        $region60: #{tpu_custom_call.1} parent=39 // pred_fallthru
          _
      $region40: #{tpu_custom_call.1} parent=5 // pred_fallthru
        _
      %p917 = scmp.le.s32.totalorder 2, %s19
      // Predicated region
      $region61: #{tpu_custom_call.1} parent=5 // pred_check
        %p918 = pneg %p917
      $region62: #{tpu_custom_call.1} parent=5 // pred_check_branch
        %920 = sbr.rel (%p918) target = $region64
      $region63: #{tpu_custom_call.1} parent=5 // pred_region
        %s921 = ssub.s32 %s19, 2
        // Predicated region
        $region65: #{tpu_custom_call.1} parent=63 // pred_check
          %p922 = pneg %p158
        $region66: #{tpu_custom_call.1} parent=63 // pred_check_branch
          %924 = sbr.rel (%p922) target = $region68
        $region67: #{tpu_custom_call.1} parent=63 // pred_region
          %s925 = sand.u32 %s143, 1
          %s926 = scalar_lea.sflag [#allocation4], %s925
          %s927 = sand.u32 %s143, 1
          %s928 = smul.addr %s927, 8
          %s929 = scalar_lea.vmem [#allocation10], %s928
          %931 = dma.done %s926, 128
        $region68: #{tpu_custom_call.1} parent=63 // pred_fallthru
          _
      $region64: #{tpu_custom_call.1} parent=5 // pred_fallthru
        _
    $region6: #{tpu_custom_call.1} parent=1 // loop_footer
      %s23 = sadd.s32 1, %s19
    $region7: #{tpu_custom_call.1} parent=1 // loop_footer_branch
      %18 = sbr.rel target = $region3
    $region8: #{tpu_custom_call.1} parent=1 // loop_exit
      _
    %932 = vsyncpa [#allocation3], 1
    %s933 = scalar_lea.sflag [#allocation3], 1
    %934 = vsyncpa %s933, 1
    %935 = vsyncpa [#allocation6], 1
    %936 = vsyncpa [#allocation9], 1
    %937 = vsyncpa [#allocation4], 1
    %s938 = scalar_lea.sflag [#allocation4], 1
    %939 = vsyncpa %s938, 1

</llo_original>
